<compile_context>
chip_gen: v5e
topology: v5e:2x2
jax: 0.10.0
libtpu: 0.0.40
codegen_flags: <defaults>
</compile_context>

<pallas_src>
import math
from functools import partial

import jax
import jax.numpy as jnp
from jax.experimental import pallas as pl
from jax.experimental.pallas import tpu as pltpu

H1, H2 = 512, 256      # hidden widths from the PyTorch module
HEAD_PAD = 128         # lane-dense fused mu|logvar head width (>= 2*latent_dim)


def _round_up(n, m):
    return ((n + m - 1) // m) * m


def _choose_batch_tile(b):
    """Pick a batch tile: multiple of 16 (bf16 sublane packing), <= 512.

    Cost model: padded compute rows + ~40 "row-equivalents" per grid step
    (pipeline overhead), with a small bonus when the grid has >= 2 steps so
    v7x megacore can shard the batch across both TensorCores. Returns
    (tile, padded_batch).
    """
    b16 = _round_up(max(b, 1), 16)
    candidates = sorted({16, 32, 64, 128, 256, 512, min(b16, 512)})
    best = None
    for tb in candidates:
        padded = _round_up(b16, tb)
        steps = padded // tb
        cost = padded + 40 * steps - (48 if steps >= 2 else 0)
        key = (cost, -tb)
        if best is None or key < best[0]:
            best = (key, tb, padded)
    return best[1], best[2]


def _encoder_kernel(x_ref, w1_ref, b1_ref, w2_ref, b2_ref, wh_ref, bh_ref, out_ref):
    # x tile: (TB, D_pad) f32 -> bf16 right before the matmul; all three matmuls
    # ride the bf16 MXU path with f32 accumulation. Bias add / ReLU stay f32.
    x = x_ref[...].astype(jnp.bfloat16)

    # fc1 + ReLU
    h1 = jnp.dot(x, w1_ref[...], preferred_element_type=jnp.float32) + b1_ref[...]
    h1 = jnp.maximum(h1, 0.0).astype(jnp.bfloat16)

    # fc2 + ReLU
    h2 = jnp.dot(h1, w2_ref[...], preferred_element_type=jnp.float32) + b2_ref[...]
    h2 = jnp.maximum(h2, 0.0).astype(jnp.bfloat16)

    # Fused, lane-dense (128-wide) mu|logvar head: one MXU push, unmasked stores.
    out_ref[...] = (jnp.dot(h2, wh_ref[...], preferred_element_type=jnp.float32)
                    + bh_ref[...]).astype(out_ref.dtype)


def prepare_encoder_params(params):
    """One-time weight prep, hoisted out of the per-call forward path.

    * zero-pads the fc1 contraction dim to a multiple of 128 (784 -> 896),
    * fuses fc_mu/fc_logvar into one zero-padded, lane-dense 128-wide head,
    * casts matmul weights to bf16 (halves resident weight VMEM + DMA bytes).
    """
    d_in = params["w1"].shape[0]
    latent = params["w_mu"].shape[1]
    d_pad = _round_up(d_in, 128)
    head = 2 * latent
    head_pad = _round_up(max(head, HEAD_PAD), 128)

    w1 = jnp.pad(params["w1"], ((0, d_pad - d_in), (0, 0))).astype(jnp.bfloat16)
    w2 = params["w2"].astype(jnp.bfloat16)
    w_head = jnp.pad(
        jnp.concatenate([params["w_mu"], params["w_logvar"]], axis=1),
        ((0, 0), (0, head_pad - head))).astype(jnp.bfloat16)
    b_head = jnp.pad(
        jnp.concatenate([params["b_mu"], params["b_logvar"]], axis=1),
        ((0, 0), (0, head_pad - head)))
    return {
        "w1": w1, "b1": params["b1"],
        "w2": w2, "b2": params["b2"],
        "w_head": w_head, "b_head": b_head,
    }


@partial(jax.jit, static_argnames=("latent_dim",))
def mnist_variational_encoder(x, prep, *, latent_dim):
    """x: (B, input_size) f32, prep from prepare_encoder_params.

    Returns (mu, logvar), each (B, latent_dim) f32.
    """
    b, d_in = x.shape
    w1, b1 = prep["w1"], prep["b1"]
    w2, b2 = prep["w2"], prep["b2"]
    wh, bh = prep["w_head"], prep["b_head"]
    d_pad = w1.shape[0]
    head_pad = wh.shape[1]

    tb, padded_b = _choose_batch_tile(b)
    # Pad batch to a tile multiple and features to the padded (128-aligned) K.
    x = jnp.pad(x, ((0, padded_b - b), (0, d_pad - d_in)))
    grid = (padded_b // tb,)

    flops = 2 * padded_b * (d_pad * H1 + H1 * H2 + H2 * head_pad)
    bytes_accessed = ((w1.size + w2.size + wh.size) * 2      # bf16 weights
                      + (b1.size + b2.size + bh.size) * 4    # f32 biases
                      + x.size * 4                           # f32 input
                      + padded_b * head_pad * 4)             # f32 output

    out = pl.pallas_call(
        _encoder_kernel,
        out_shape=jax.ShapeDtypeStruct((padded_b, head_pad), jnp.float32),
        grid_spec=pltpu.PrefetchScalarGridSpec(
            num_scalar_prefetch=0,
            grid=grid,
            in_specs=[
                pl.BlockSpec((tb, d_pad), lambda i: (i, 0)),     # x: batch tiled
                pl.BlockSpec((d_pad, H1), lambda i: (0, 0)),     # w1: VMEM resident
                pl.BlockSpec((1, H1), lambda i: (0, 0)),         # b1
                pl.BlockSpec((H1, H2), lambda i: (0, 0)),        # w2
                pl.BlockSpec((1, H2), lambda i: (0, 0)),         # b2
                pl.BlockSpec((H2, head_pad), lambda i: (0, 0)),  # [w_mu|w_logvar|0]
                pl.BlockSpec((1, head_pad), lambda i: (0, 0)),   # [b_mu|b_logvar|0]
            ],
            out_specs=pl.BlockSpec((tb, head_pad), lambda i: (i, 0)),
        ),
        compiler_params=pltpu.CompilerParams(
            dimension_semantics=("parallel",),   # megacore batch split on v7x
            vmem_limit_bytes=32 * 1024 * 1024,   # footprint <= ~12 MiB at tb=512
        ),
        cost_estimate=pl.CostEstimate(
            flops=flops, transcendentals=0, bytes_accessed=bytes_accessed),
    )(x, w1, b1, w2, b2, wh, bh)

    # Slice off batch padding and the zero-padded head columns.
    return out[:b, :latent_dim], out[:b, latent_dim:2 * latent_dim]


def init_params(key, input_size, latent_dim):
    """nn.Linear-style init U(-1/sqrt(fan_in), +1/sqrt(fan_in)).

    Weights stored pre-transposed: (fan_in, fan_out). Biases: (1, fan_out).
    """
    dims = [(input_size, H1), (H1, H2), (H2, latent_dim), (H2, latent_dim)]
    names = ["1", "2", "_mu", "_logvar"]
    params = {}
    keys = jax.random.split(key, 2 * len(dims))
    for i, ((fan_in, fan_out), name) in enumerate(zip(dims, names)):
        bound = 1.0 / math.sqrt(fan_in)
        params[f"w{name}"] = jax.random.uniform(
            keys[2 * i], (fan_in, fan_out), jnp.float32, -bound, bound)
        params[f"b{name}"] = jax.random.uniform(
            keys[2 * i + 1], (1, fan_out), jnp.float32, -bound, bound)
    return params


def reference_forward_bf16(x, params):
    """Same math as the kernel (bf16 matmul operands, f32 accumulation)."""
    xb = x.astype(jnp.bfloat16)
    w1 = params["w1"].astype(jnp.bfloat16)
    w2 = params["w2"].astype(jnp.bfloat16)
    wmu = params["w_mu"].astype(jnp.bfloat16)
    wlv = params["w_logvar"].astype(jnp.bfloat16)
    h1 = jnp.maximum(jnp.dot(xb, w1, preferred_element_type=jnp.float32)
                     + params["b1"], 0.0).astype(jnp.bfloat16)
    h2 = jnp.maximum(jnp.dot(h1, w2, preferred_element_type=jnp.float32)
                     + params["b2"], 0.0).astype(jnp.bfloat16)
    mu = jnp.dot(h2, wmu, preferred_element_type=jnp.float32) + params["b_mu"]
    lv = jnp.dot(h2, wlv, preferred_element_type=jnp.float32) + params["b_logvar"]
    return mu, lv


def reference_forward_f32(x, params):
    h1 = jnp.maximum(x @ params["w1"] + params["b1"], 0.0)
    h2 = jnp.maximum(h1 @ params["w2"] + params["b2"], 0.0)
    return (h2 @ params["w_mu"] + params["b_mu"],
            h2 @ params["w_logvar"] + params["b_logvar"])


if __name__ == "__main__":
    input_size = 784   # flattened 28x28 MNIST image
    latent_dim = 32
    batch = 8

    key = jax.random.PRNGKey(0)
    k_params, k_x = jax.random.split(key)
    params = init_params(k_params, input_size, latent_dim)
    x = jax.random.normal(k_x, (batch, input_size), jnp.float32)

    # One-time prep (head fusion, K padding, bf16 cast) outside the forward path.
    prep = prepare_encoder_params(params)

    mu, logvar = mnist_variational_encoder(x, prep, latent_dim=latent_dim)
    jax.block_until_ready((mu, logvar))

    assert mu.shape == (batch, latent_dim) and logvar.shape == (batch, latent_dim)

    # Tight check against a reference using identical bf16/f32 math.
    mu_bf, lv_bf = reference_forward_bf16(x, params)
    assert jnp.allclose(mu, mu_bf, atol=1e-2, rtol=1e-2)
    assert jnp.allclose(logvar, lv_bf, atol=1e-2, rtol=1e-2)

    # Loose sanity check against the full-f32 forward (bf16 weights lose ~0.4%/layer).
    mu_f32, lv_f32 = reference_forward_f32(x, params)
    assert jnp.allclose(mu, mu_f32, atol=1.5e-1, rtol=1.5e-1)
    assert jnp.allclose(logvar, lv_f32, atol=1.5e-1, rtol=1.5e-1)

    print("KERNEL_OK")
</pallas_src>

<mosaic_0001>
module attributes {stable_mosaic.version = 11 : i64} {
  func.func @_encoder_kernel(%arg0: i32, %arg1: memref<16x896xf32, #tpu.memory_space<vmem>>, %arg2: memref<896x512xbf16, #tpu.memory_space<vmem>>, %arg3: memref<1x512xf32, #tpu.memory_space<vmem>>, %arg4: memref<512x256xbf16, #tpu.memory_space<vmem>>, %arg5: memref<1x256xf32, #tpu.memory_space<vmem>>, %arg6: memref<256x128xbf16, #tpu.memory_space<vmem>>, %arg7: memref<1x128xf32, #tpu.memory_space<vmem>>, %arg8: memref<16x128xf32, #tpu.memory_space<vmem>>) attributes {dimension_semantics = [#tpu.dimension_semantics<parallel>], iteration_bounds = array<i64: 1>, scalar_prefetch = 0 : i64, scratch_operands = 0 : i64, tpu.core_type = #tpu.core_type<tc>, window_params = [{transform_indices = @transform_0, window_bounds = array<i64: 16, 896>}, {pipeline_mode = #tpu.pipeline_mode<synchronous>, transform_indices = @transform_1, window_bounds = array<i64: 896, 512>}, {pipeline_mode = #tpu.pipeline_mode<synchronous>, transform_indices = @transform_2, window_bounds = array<i64: 1, 512>}, {pipeline_mode = #tpu.pipeline_mode<synchronous>, transform_indices = @transform_3, window_bounds = array<i64: 512, 256>}, {pipeline_mode = #tpu.pipeline_mode<synchronous>, transform_indices = @transform_4, window_bounds = array<i64: 1, 256>}, {pipeline_mode = #tpu.pipeline_mode<synchronous>, transform_indices = @transform_5, window_bounds = array<i64: 256, 128>}, {pipeline_mode = #tpu.pipeline_mode<synchronous>, transform_indices = @transform_6, window_bounds = array<i64: 1, 128>}, {transform_indices = @transform_7, window_bounds = array<i64: 16, 128>}]} {
    %c0 = arith.constant 0 : index
    %c0_0 = arith.constant 0 : index
    %0 = vector.load %arg1[%c0, %c0_0] : memref<16x896xf32, #tpu.memory_space<vmem>>, vector<16x896xf32>
    %1 = arith.truncf %0 : vector<16x896xf32> to vector<16x896xbf16>
    %c0_1 = arith.constant 0 : index
    %c0_2 = arith.constant 0 : index
    %2 = vector.load %arg2[%c0_1, %c0_2] : memref<896x512xbf16, #tpu.memory_space<vmem>>, vector<896x512xbf16>
    %cst = arith.constant dense<0.000000e+00> : vector<16x512xf32>
    %3 = tpu.matmul %1, %2, %cst {dimension_numbers = #tpu.dot_dimension_numbers<[1], [0], [0], [1], [0, 0, 1, 1], [], []>} : vector<16x896xbf16>, vector<896x512xbf16>, vector<16x512xf32> -> vector<16x512xf32>
    %c0_3 = arith.constant 0 : index
    %c0_4 = arith.constant 0 : index
    %4 = vector.load %arg3[%c0_3, %c0_4] : memref<1x512xf32, #tpu.memory_space<vmem>>, vector<1x512xf32>
    %5 = vector.broadcast %4 : vector<1x512xf32> to vector<16x512xf32>
    %6 = arith.addf %3, %5 : vector<16x512xf32>
    %cst_5 = arith.constant 0.000000e+00 : f32
    %7 = vector.broadcast %cst_5 : f32 to vector<16x512xf32>
    %8 = arith.maximumf %6, %7 : vector<16x512xf32>
    %9 = arith.truncf %8 : vector<16x512xf32> to vector<16x512xbf16>
    %c0_6 = arith.constant 0 : index
    %c0_7 = arith.constant 0 : index
    %10 = vector.load %arg4[%c0_6, %c0_7] : memref<512x256xbf16, #tpu.memory_space<vmem>>, vector<512x256xbf16>
    %cst_8 = arith.constant dense<0.000000e+00> : vector<16x256xf32>
    %11 = tpu.matmul %9, %10, %cst_8 {dimension_numbers = #tpu.dot_dimension_numbers<[1], [0], [0], [1], [0, 0, 1, 1], [], []>} : vector<16x512xbf16>, vector<512x256xbf16>, vector<16x256xf32> -> vector<16x256xf32>
    %c0_9 = arith.constant 0 : index
    %c0_10 = arith.constant 0 : index
    %12 = vector.load %arg5[%c0_9, %c0_10] : memref<1x256xf32, #tpu.memory_space<vmem>>, vector<1x256xf32>
    %13 = vector.broadcast %12 : vector<1x256xf32> to vector<16x256xf32>
    %14 = arith.addf %11, %13 : vector<16x256xf32>
    %cst_11 = arith.constant 0.000000e+00 : f32
    %15 = vector.broadcast %cst_11 : f32 to vector<16x256xf32>
    %16 = arith.maximumf %14, %15 : vector<16x256xf32>
    %17 = arith.truncf %16 : vector<16x256xf32> to vector<16x256xbf16>
    %c0_12 = arith.constant 0 : index
    %c0_13 = arith.constant 0 : index
    %18 = vector.load %arg6[%c0_12, %c0_13] : memref<256x128xbf16, #tpu.memory_space<vmem>>, vector<256x128xbf16>
    %cst_14 = arith.constant dense<0.000000e+00> : vector<16x128xf32>
    %19 = tpu.matmul %17, %18, %cst_14 {dimension_numbers = #tpu.dot_dimension_numbers<[1], [0], [0], [1], [0, 0, 1, 1], [], []>} : vector<16x256xbf16>, vector<256x128xbf16>, vector<16x128xf32> -> vector<16x128xf32>
    %c0_15 = arith.constant 0 : index
    %c0_16 = arith.constant 0 : index
    %20 = vector.load %arg7[%c0_15, %c0_16] : memref<1x128xf32, #tpu.memory_space<vmem>>, vector<1x128xf32>
    %21 = vector.broadcast %20 : vector<1x128xf32> to vector<16x128xf32>
    %22 = arith.addf %19, %21 : vector<16x128xf32>
    %c0_17 = arith.constant 0 : index
    %c0_18 = arith.constant 0 : index
    %23 = vector.load %arg8[%c0_17, %c0_18] : memref<16x128xf32, #tpu.memory_space<vmem>>, vector<16x128xf32>
    tpu.vector_store %arg8[%c0_17, %c0_18], %22 {strides = array<i32>} : memref<16x128xf32, #tpu.memory_space<vmem>>, vector<16x128xf32>,
    return
  }
  func.func @transform_0(%arg0: i32) -> (i32, i32) {
    %c0_i32 = arith.constant 0 : i32
    %c0_i32_0 = arith.constant 0 : i32
    return %arg0, %c0_i32 : i32, i32
  }
  func.func @transform_1(%arg0: i32) -> (i32, i32) {
    %c0_i32 = arith.constant 0 : i32
    %c0_i32_0 = arith.constant 0 : i32
    %c0_i32_1 = arith.constant 0 : i32
    return %c0_i32, %c0_i32_0 : i32, i32
  }
  func.func @transform_2(%arg0: i32) -> (i32, i32) {
    %c0_i32 = arith.constant 0 : i32
    %c0_i32_0 = arith.constant 0 : i32
    %c0_i32_1 = arith.constant 0 : i32
    return %c0_i32, %c0_i32_0 : i32, i32
  }
  func.func @transform_3(%arg0: i32) -> (i32, i32) {
    %c0_i32 = arith.constant 0 : i32
    %c0_i32_0 = arith.constant 0 : i32
    %c0_i32_1 = arith.constant 0 : i32
    return %c0_i32, %c0_i32_0 : i32, i32
  }
  func.func @transform_4(%arg0: i32) -> (i32, i32) {
    %c0_i32 = arith.constant 0 : i32
    %c0_i32_0 = arith.constant 0 : i32
    %c0_i32_1 = arith.constant 0 : i32
    return %c0_i32, %c0_i32_0 : i32, i32
  }
  func.func @transform_5(%arg0: i32) -> (i32, i32) {
    %c0_i32 = arith.constant 0 : i32
    %c0_i32_0 = arith.constant 0 : i32
    %c0_i32_1 = arith.constant 0 : i32
    return %c0_i32, %c0_i32_0 : i32, i32
  }
  func.func @transform_6(%arg0: i32) -> (i32, i32) {
    %c0_i32 = arith.constant 0 : i32
    %c0_i32_0 = arith.constant 0 : i32
    %c0_i32_1 = arith.constant 0 : i32
    return %c0_i32, %c0_i32_0 : i32, i32
  }
  func.func @transform_7(%arg0: i32) -> (i32, i32) {
    %c0_i32 = arith.constant 0 : i32
    %c0_i32_0 = arith.constant 0 : i32
    return %arg0, %c0_i32 : i32, i32
  }
}

</mosaic_0001>

<llo_original>
// kernel: mnist_variational_encoder.1
$region0: #{mnist_variational_encoder.1}
  #allocation0 [shape = 'u32[]', space=smem, size = 0x4, offset = 0x4, fixed_abs, tag = 'smem constant byte address 0x4 - core index']
  #allocation1 [shape = 'u32[72,128]{1,0:T(1,128)}', space=vmem, size = 0x9000, scoped, tag = 'internal scratch']
  %s0 = inlined_call_operand.vmem [shape: f32[16,896], index: 0, kind: input, shape index: {}]
  %s1 = inlined_call_operand.hbm [shape: bf16[896,512], index: 1, kind: input, shape index: {}]
  %s2 = inlined_call_operand.vmem [shape: f32[1,512], index: 2, kind: input, shape index: {}]
  %s3 = inlined_call_operand.hbm [shape: bf16[512,256], index: 3, kind: input, shape index: {}]
  %s4 = inlined_call_operand.vmem [shape: f32[1,256], index: 4, kind: input, shape index: {}]
  %s5 = inlined_call_operand.vmem [shape: bf16[256,128], index: 5, kind: input, shape index: {}]
  %s6 = inlined_call_operand.vmem [shape: f32[1,128], index: 6, kind: input, shape index: {}]
  %s7 = inlined_call_operand.vmem [shape: f32[16,128], index: 7, kind: output, shape index: {}]
  %s8 = sld [smem:[#allocation0]]
  $region46: #{mnist_variational_encoder.1} parent=0
    _
  %s10 = ssub.s32 1, %s8
  %s11 = scalar_select 0, %s10, %s8
  $region1: #{mnist_variational_encoder.1} parent=0
    #allocation2 [shape = 'u8[917504]{0}', space=vmem, size = 0xe0000, scoped, tag = 'input window, operand 1, single buffered']
    #allocation3 [shape = 's32[1]{0}', space=sflag, size = 0x4, scoped, tag = 'scoped memory for mnist_variational_encoder.1']
    #allocation4 [shape = 'u8[262144]{0}', space=vmem, size = 0x40000, scoped, tag = 'input window, operand 3, single buffered']
    #allocation5 [shape = 's32[1]{0}', space=sflag, size = 0x4, scoped, tag = 'scoped memory for mnist_variational_encoder.1']
    %12 = vsyncpa [#allocation3], 0
    %13 = vsyncpa [#allocation5], 0
    // Predicated region
    $region2: #{mnist_variational_encoder.1} parent=1 // pred_check
      _
    $region3: #{mnist_variational_encoder.1} parent=1 // pred_check_branch
      %15 = sbr.rel (0) target = $region5
    $region4: #{mnist_variational_encoder.1} parent=1 // pred_region
      _
    $region5: #{mnist_variational_encoder.1} parent=1 // pred_fallthru
      _
    // Predicated region
    $region6: #{mnist_variational_encoder.1} parent=1 // pred_check
      _
    $region7: #{mnist_variational_encoder.1} parent=1 // pred_check_branch
      %17 = sbr.rel (0) target = $region9
    $region8: #{mnist_variational_encoder.1} parent=1 // pred_region
      %19 = vsyncadd [#allocation3], 0
      %s20 = sshll.u32 %s1, 4
      %s21 = int_to_ptr.hbm [resolvable:$true] %s20
      %s22 = sshll.u32 [#allocation2], 4
      %s23 = int_to_ptr.vmem [resolvable:$true] %s22
      %28 = dma.hbm_to_vmem [thread:$0]  %s21, 28672, %s23, [#allocation3], 256, 256, 16
    $region9: #{mnist_variational_encoder.1} parent=1 // pred_fallthru
      _
    // Predicated region
    $region10: #{mnist_variational_encoder.1} parent=1 // pred_check
      _
    $region11: #{mnist_variational_encoder.1} parent=1 // pred_check_branch
      %30 = sbr.rel (0) target = $region13
    $region12: #{mnist_variational_encoder.1} parent=1 // pred_region
      _
    $region13: #{mnist_variational_encoder.1} parent=1 // pred_fallthru
      _
    // Predicated region
    $region14: #{mnist_variational_encoder.1} parent=1 // pred_check
      _
    $region15: #{mnist_variational_encoder.1} parent=1 // pred_check_branch
      %32 = sbr.rel (0) target = $region17
    $region16: #{mnist_variational_encoder.1} parent=1 // pred_region
      %34 = vsyncadd [#allocation5], 0
      %s35 = sshll.u32 %s3, 4
      %s36 = int_to_ptr.hbm [resolvable:$true] %s35
      %s37 = sshll.u32 [#allocation4], 4
      %s38 = int_to_ptr.vmem [resolvable:$true] %s37
      %43 = dma.hbm_to_vmem [thread:$0]  %s36, 8192, %s38, [#allocation5], 128, 128, 8
    $region17: #{mnist_variational_encoder.1} parent=1 // pred_fallthru
      _
    // Predicated region
    $region18: #{mnist_variational_encoder.1} parent=1 // pred_check
      _
    $region19: #{mnist_variational_encoder.1} parent=1 // pred_check_branch
      %45 = sbr.rel (0) target = $region21
    $region20: #{mnist_variational_encoder.1} parent=1 // pred_region
      _
    $region21: #{mnist_variational_encoder.1} parent=1 // pred_fallthru
      _
    // Predicated region
    $region22: #{mnist_variational_encoder.1} parent=1 // pred_check
      _
    $region23: #{mnist_variational_encoder.1} parent=1 // pred_check_branch
      %47 = sbr.rel (0) target = $region25
    $region24: #{mnist_variational_encoder.1} parent=1 // pred_region
      _
    $region25: #{mnist_variational_encoder.1} parent=1 // pred_fallthru
      _
    // Predicated region
    $region26: #{mnist_variational_encoder.1} parent=1 // pred_check
      _
    $region27: #{mnist_variational_encoder.1} parent=1 // pred_check_branch
      %49 = sbr.rel (0) target = $region29
    $region28: #{mnist_variational_encoder.1} parent=1 // pred_region
      _
    $region29: #{mnist_variational_encoder.1} parent=1 // pred_fallthru
      _
    // Predicated region
    $region30: #{mnist_variational_encoder.1} parent=1 // pred_check
      _
    $region31: #{mnist_variational_encoder.1} parent=1 // pred_check_branch
      %51 = sbr.rel (0) target = $region33
    $region32: #{mnist_variational_encoder.1} parent=1 // pred_region
      %53 = dma.done [#allocation3], 28672
    $region33: #{mnist_variational_encoder.1} parent=1 // pred_fallthru
      _
    // Predicated region
    $region34: #{mnist_variational_encoder.1} parent=1 // pred_check
      _
    $region35: #{mnist_variational_encoder.1} parent=1 // pred_check_branch
      %55 = sbr.rel (0) target = $region37
    $region36: #{mnist_variational_encoder.1} parent=1 // pred_region
      %57 = dma.done [#allocation5], 8192
    $region37: #{mnist_variational_encoder.1} parent=1 // pred_fallthru
      _
    %v58 = vld [vmem:[%s0] sm:$0xff]
    %v59 = vld [vmem:[%s0 + $0x8] sm:$0xff]
    %v60 = vld [vmem:[%s0 + $0x10] sm:$0xff]
    %v61 = vld [vmem:[%s0 + $0x18] sm:$0xff]
    %v62 = vld [vmem:[%s0 + $0x20] sm:$0xff]
    %v63 = vld [vmem:[%s0 + $0x28] sm:$0xff]
    %v64 = vld [vmem:[%s0 + $0x30] sm:$0xff]
    %v65 = vld [vmem:[%s0 + $0x38] sm:$0xff]
    %v66 = vld [vmem:[%s0 + $0x40] sm:$0xff]
    %v67 = vld [vmem:[%s0 + $0x48] sm:$0xff]
    %v68 = vld [vmem:[%s0 + $0x50] sm:$0xff]
    %v69 = vld [vmem:[%s0 + $0x58] sm:$0xff]
    %v70 = vld [vmem:[%s0 + $0x60] sm:$0xff]
    %v71 = vld [vmem:[%s0 + $0x68] sm:$0xff]
    %v72 = vpack.c.bf16 %v65, %v58
    %v73 = vpack.c.bf16 %v66, %v59
    %v74 = vpack.c.bf16 %v67, %v60
    %v75 = vpack.c.bf16 %v68, %v61
    %v76 = vpack.c.bf16 %v69, %v62
    %v77 = vpack.c.bf16 %v70, %v63
    %v78 = vpack.c.bf16 %v71, %v64
    %v79 = vld [vmem:[#allocation2] sm:$0xff]
    %v80 = vld [vmem:[#allocation2 + $0x8] sm:$0xff]
    %v81 = vld [vmem:[#allocation2 + $0x10] sm:$0xff]
    %v82 = vld [vmem:[#allocation2 + $0x18] sm:$0xff]
    %v83 = vld [vmem:[#allocation2 + $0x20] sm:$0xff]
    %v84 = vld [vmem:[#allocation2 + $0x28] sm:$0xff]
    %v85 = vld [vmem:[#allocation2 + $0x30] sm:$0xff]
    %v86 = vld [vmem:[#allocation2 + $0x38] sm:$0xff]
    %v87 = vld [vmem:[#allocation2 + $0x40] sm:$0xff]
    %v88 = vld [vmem:[#allocation2 + $0x48] sm:$0xff]
    %v89 = vld [vmem:[#allocation2 + $0x50] sm:$0xff]
    %v90 = vld [vmem:[#allocation2 + $0x58] sm:$0xff]
    %v91 = vld [vmem:[#allocation2 + $0x60] sm:$0xff]
    %v92 = vld [vmem:[#allocation2 + $0x68] sm:$0xff]
    %v93 = vld [vmem:[#allocation2 + $0x70] sm:$0xff]
    %v94 = vld [vmem:[#allocation2 + $0x78] sm:$0xff]
    %v95 = vld [vmem:[#allocation2 + $0x80] sm:$0xff]
    %v96 = vld [vmem:[#allocation2 + $0x88] sm:$0xff]
    %v97 = vld [vmem:[#allocation2 + $0x90] sm:$0xff]
    %v98 = vld [vmem:[#allocation2 + $0x98] sm:$0xff]
    %v99 = vld [vmem:[#allocation2 + $0xa0] sm:$0xff]
    %v100 = vld [vmem:[#allocation2 + $0xa8] sm:$0xff]
    %v101 = vld [vmem:[#allocation2 + $0xb0] sm:$0xff]
    %v102 = vld [vmem:[#allocation2 + $0xb8] sm:$0xff]
    %v103 = vld [vmem:[#allocation2 + $0xc0] sm:$0xff]
    %v104 = vld [vmem:[#allocation2 + $0xc8] sm:$0xff]
    %v105 = vld [vmem:[#allocation2 + $0xd0] sm:$0xff]
    %v106 = vld [vmem:[#allocation2 + $0xd8] sm:$0xff]
    %v107 = vld [vmem:[#allocation2 + $0xe0] sm:$0xff]
    %v108 = vld [vmem:[#allocation2 + $0xe8] sm:$0xff]
    %v109 = vld [vmem:[#allocation2 + $0xf0] sm:$0xff]
    %v110 = vld [vmem:[#allocation2 + $0xf8] sm:$0xff]
    %v111 = vld [vmem:[#allocation2 + $0x100] sm:$0xff]
    %v112 = vld [vmem:[#allocation2 + $0x108] sm:$0xff]
    %v113 = vld [vmem:[#allocation2 + $0x110] sm:$0xff]
    %v114 = vld [vmem:[#allocation2 + $0x118] sm:$0xff]
    %v115 = vld [vmem:[#allocation2 + $0x120] sm:$0xff]
    %v116 = vld [vmem:[#allocation2 + $0x128] sm:$0xff]
    %v117 = vld [vmem:[#allocation2 + $0x130] sm:$0xff]
    %v118 = vld [vmem:[#allocation2 + $0x138] sm:$0xff]
    %v119 = vld [vmem:[#allocation2 + $0x140] sm:$0xff]
    %v120 = vld [vmem:[#allocation2 + $0x148] sm:$0xff]
    %v121 = vld [vmem:[#allocation2 + $0x150] sm:$0xff]
    %v122 = vld [vmem:[#allocation2 + $0x158] sm:$0xff]
    %v123 = vld [vmem:[#allocation2 + $0x160] sm:$0xff]
    %v124 = vld [vmem:[#allocation2 + $0x168] sm:$0xff]
    %v125 = vld [vmem:[#allocation2 + $0x170] sm:$0xff]
    %v126 = vld [vmem:[#allocation2 + $0x178] sm:$0xff]
    %v127 = vld [vmem:[#allocation2 + $0x180] sm:$0xff]
    %v128 = vld [vmem:[#allocation2 + $0x188] sm:$0xff]
    %v129 = vld [vmem:[#allocation2 + $0x190] sm:$0xff]
    %v130 = vld [vmem:[#allocation2 + $0x198] sm:$0xff]
    %v131 = vld [vmem:[#allocation2 + $0x1a0] sm:$0xff]
    %v132 = vld [vmem:[#allocation2 + $0x1a8] sm:$0xff]
    %v133 = vld [vmem:[#allocation2 + $0x1b0] sm:$0xff]
    %v134 = vld [vmem:[#allocation2 + $0x1b8] sm:$0xff]
    %v135 = vld [vmem:[#allocation2 + $0x1c0] sm:$0xff]
    %v136 = vld [vmem:[#allocation2 + $0x1c8] sm:$0xff]
    %v137 = vld [vmem:[#allocation2 + $0x1d0] sm:$0xff]
    %v138 = vld [vmem:[#allocation2 + $0x1d8] sm:$0xff]
    %v139 = vld [vmem:[#allocation2 + $0x1e0] sm:$0xff]
    %v140 = vld [vmem:[#allocation2 + $0x1e8] sm:$0xff]
    %v141 = vld [vmem:[#allocation2 + $0x1f0] sm:$0xff]
    %v142 = vld [vmem:[#allocation2 + $0x1f8] sm:$0xff]
    %v143 = vld [vmem:[#allocation2 + $0x200] sm:$0xff]
    %v144 = vld [vmem:[#allocation2 + $0x208] sm:$0xff]
    %v145 = vld [vmem:[#allocation2 + $0x210] sm:$0xff]
    %v146 = vld [vmem:[#allocation2 + $0x218] sm:$0xff]
    %v147 = vld [vmem:[#allocation2 + $0x220] sm:$0xff]
    %v148 = vld [vmem:[#allocation2 + $0x228] sm:$0xff]
    %v149 = vld [vmem:[#allocation2 + $0x230] sm:$0xff]
    %v150 = vld [vmem:[#allocation2 + $0x238] sm:$0xff]
    %v151 = vld [vmem:[#allocation2 + $0x240] sm:$0xff]
    %v152 = vld [vmem:[#allocation2 + $0x248] sm:$0xff]
    %v153 = vld [vmem:[#allocation2 + $0x250] sm:$0xff]
    %v154 = vld [vmem:[#allocation2 + $0x258] sm:$0xff]
    %v155 = vld [vmem:[#allocation2 + $0x260] sm:$0xff]
    %v156 = vld [vmem:[#allocation2 + $0x268] sm:$0xff]
    %v157 = vld [vmem:[#allocation2 + $0x270] sm:$0xff]
    %v158 = vld [vmem:[#allocation2 + $0x278] sm:$0xff]
    %v159 = vld [vmem:[#allocation2 + $0x280] sm:$0xff]
    %v160 = vld [vmem:[#allocation2 + $0x288] sm:$0xff]
    %v161 = vld [vmem:[#allocation2 + $0x290] sm:$0xff]
    %v162 = vld [vmem:[#allocation2 + $0x298] sm:$0xff]
    %v163 = vld [vmem:[#allocation2 + $0x2a0] sm:$0xff]
    %v164 = vld [vmem:[#allocation2 + $0x2a8] sm:$0xff]
    %v165 = vld [vmem:[#allocation2 + $0x2b0] sm:$0xff]
    %v166 = vld [vmem:[#allocation2 + $0x2b8] sm:$0xff]
    %v167 = vld [vmem:[#allocation2 + $0x2c0] sm:$0xff]
    %v168 = vld [vmem:[#allocation2 + $0x2c8] sm:$0xff]
    %v169 = vld [vmem:[#allocation2 + $0x2d0] sm:$0xff]
    %v170 = vld [vmem:[#allocation2 + $0x2d8] sm:$0xff]
    %v171 = vld [vmem:[#allocation2 + $0x2e0] sm:$0xff]
    %v172 = vld [vmem:[#allocation2 + $0x2e8] sm:$0xff]
    %v173 = vld [vmem:[#allocation2 + $0x2f0] sm:$0xff]
    %v174 = vld [vmem:[#allocation2 + $0x2f8] sm:$0xff]
    %v175 = vld [vmem:[#allocation2 + $0x300] sm:$0xff]
    %v176 = vld [vmem:[#allocation2 + $0x308] sm:$0xff]
    %v177 = vld [vmem:[#allocation2 + $0x310] sm:$0xff]
    %v178 = vld [vmem:[#allocation2 + $0x318] sm:$0xff]
    %v179 = vld [vmem:[#allocation2 + $0x320] sm:$0xff]
    %v180 = vld [vmem:[#allocation2 + $0x328] sm:$0xff]
    %v181 = vld [vmem:[#allocation2 + $0x330] sm:$0xff]
    %v182 = vld [vmem:[#allocation2 + $0x338] sm:$0xff]
    %v183 = vld [vmem:[#allocation2 + $0x340] sm:$0xff]
    %v184 = vld [vmem:[#allocation2 + $0x348] sm:$0xff]
    %v185 = vld [vmem:[#allocation2 + $0x350] sm:$0xff]
    %v186 = vld [vmem:[#allocation2 + $0x358] sm:$0xff]
    %v187 = vld [vmem:[#allocation2 + $0x360] sm:$0xff]
    %v188 = vld [vmem:[#allocation2 + $0x368] sm:$0xff]
    %v189 = vld [vmem:[#allocation2 + $0x370] sm:$0xff]
    %v190 = vld [vmem:[#allocation2 + $0x378] sm:$0xff]
    %v191 = vld [vmem:[#allocation2 + $0x380] sm:$0xff]
    %v192 = vld [vmem:[#allocation2 + $0x388] sm:$0xff]
    %v193 = vld [vmem:[#allocation2 + $0x390] sm:$0xff]
    %v194 = vld [vmem:[#allocation2 + $0x398] sm:$0xff]
    %v195 = vld [vmem:[#allocation2 + $0x3a0] sm:$0xff]
    %v196 = vld [vmem:[#allocation2 + $0x3a8] sm:$0xff]
    %v197 = vld [vmem:[#allocation2 + $0x3b0] sm:$0xff]
    %v198 = vld [vmem:[#allocation2 + $0x3b8] sm:$0xff]
    %v199 = vld [vmem:[#allocation2 + $0x3c0] sm:$0xff]
    %v200 = vld [vmem:[#allocation2 + $0x3c8] sm:$0xff]
    %v201 = vld [vmem:[#allocation2 + $0x3d0] sm:$0xff]
    %v202 = vld [vmem:[#allocation2 + $0x3d8] sm:$0xff]
    %v203 = vld [vmem:[#allocation2 + $0x3e0] sm:$0xff]
    %v204 = vld [vmem:[#allocation2 + $0x3e8] sm:$0xff]
    %v205 = vld [vmem:[#allocation2 + $0x3f0] sm:$0xff]
    %v206 = vld [vmem:[#allocation2 + $0x3f8] sm:$0xff]
    %v207 = vld [vmem:[#allocation2 + $0x400] sm:$0xff]
    %v208 = vld [vmem:[#allocation2 + $0x408] sm:$0xff]
    %v209 = vld [vmem:[#allocation2 + $0x410] sm:$0xff]
    %v210 = vld [vmem:[#allocation2 + $0x418] sm:$0xff]
    %v211 = vld [vmem:[#allocation2 + $0x420] sm:$0xff]
    %v212 = vld [vmem:[#allocation2 + $0x428] sm:$0xff]
    %v213 = vld [vmem:[#allocation2 + $0x430] sm:$0xff]
    %v214 = vld [vmem:[#allocation2 + $0x438] sm:$0xff]
    %v215 = vld [vmem:[#allocation2 + $0x440] sm:$0xff]
    %v216 = vld [vmem:[#allocation2 + $0x448] sm:$0xff]
    %v217 = vld [vmem:[#allocation2 + $0x450] sm:$0xff]
    %v218 = vld [vmem:[#allocation2 + $0x458] sm:$0xff]
    %v219 = vld [vmem:[#allocation2 + $0x460] sm:$0xff]
    %v220 = vld [vmem:[#allocation2 + $0x468] sm:$0xff]
    %v221 = vld [vmem:[#allocation2 + $0x470] sm:$0xff]
    %v222 = vld [vmem:[#allocation2 + $0x478] sm:$0xff]
    %v223 = vld [vmem:[#allocation2 + $0x480] sm:$0xff]
    %v224 = vld [vmem:[#allocation2 + $0x488] sm:$0xff]
    %v225 = vld [vmem:[#allocation2 + $0x490] sm:$0xff]
    %v226 = vld [vmem:[#allocation2 + $0x498] sm:$0xff]
    %v227 = vld [vmem:[#allocation2 + $0x4a0] sm:$0xff]
    %v228 = vld [vmem:[#allocation2 + $0x4a8] sm:$0xff]
    %v229 = vld [vmem:[#allocation2 + $0x4b0] sm:$0xff]
    %v230 = vld [vmem:[#allocation2 + $0x4b8] sm:$0xff]
    %v231 = vld [vmem:[#allocation2 + $0x4c0] sm:$0xff]
    %v232 = vld [vmem:[#allocation2 + $0x4c8] sm:$0xff]
    %v233 = vld [vmem:[#allocation2 + $0x4d0] sm:$0xff]
    %v234 = vld [vmem:[#allocation2 + $0x4d8] sm:$0xff]
    %v235 = vld [vmem:[#allocation2 + $0x4e0] sm:$0xff]
    %v236 = vld [vmem:[#allocation2 + $0x4e8] sm:$0xff]
    %v237 = vld [vmem:[#allocation2 + $0x4f0] sm:$0xff]
    %v238 = vld [vmem:[#allocation2 + $0x4f8] sm:$0xff]
    %v239 = vld [vmem:[#allocation2 + $0x500] sm:$0xff]
    %v240 = vld [vmem:[#allocation2 + $0x508] sm:$0xff]
    %v241 = vld [vmem:[#allocation2 + $0x510] sm:$0xff]
    %v242 = vld [vmem:[#allocation2 + $0x518] sm:$0xff]
    %v243 = vld [vmem:[#allocation2 + $0x520] sm:$0xff]
    %v244 = vld [vmem:[#allocation2 + $0x528] sm:$0xff]
    %v245 = vld [vmem:[#allocation2 + $0x530] sm:$0xff]
    %v246 = vld [vmem:[#allocation2 + $0x538] sm:$0xff]
    %v247 = vld [vmem:[#allocation2 + $0x540] sm:$0xff]
    %v248 = vld [vmem:[#allocation2 + $0x548] sm:$0xff]
    %v249 = vld [vmem:[#allocation2 + $0x550] sm:$0xff]
    %v250 = vld [vmem:[#allocation2 + $0x558] sm:$0xff]
    %v251 = vld [vmem:[#allocation2 + $0x560] sm:$0xff]
    %v252 = vld [vmem:[#allocation2 + $0x568] sm:$0xff]
    %v253 = vld [vmem:[#allocation2 + $0x570] sm:$0xff]
    %v254 = vld [vmem:[#allocation2 + $0x578] sm:$0xff]
    %v255 = vld [vmem:[#allocation2 + $0x580] sm:$0xff]
    %v256 = vld [vmem:[#allocation2 + $0x588] sm:$0xff]
    %v257 = vld [vmem:[#allocation2 + $0x590] sm:$0xff]
    %v258 = vld [vmem:[#allocation2 + $0x598] sm:$0xff]
    %v259 = vld [vmem:[#allocation2 + $0x5a0] sm:$0xff]
    %v260 = vld [vmem:[#allocation2 + $0x5a8] sm:$0xff]
    %v261 = vld [vmem:[#allocation2 + $0x5b0] sm:$0xff]
    %v262 = vld [vmem:[#allocation2 + $0x5b8] sm:$0xff]
    %v263 = vld [vmem:[#allocation2 + $0x5c0] sm:$0xff]
    %v264 = vld [vmem:[#allocation2 + $0x5c8] sm:$0xff]
    %v265 = vld [vmem:[#allocation2 + $0x5d0] sm:$0xff]
    %v266 = vld [vmem:[#allocation2 + $0x5d8] sm:$0xff]
    %v267 = vld [vmem:[#allocation2 + $0x5e0] sm:$0xff]
    %v268 = vld [vmem:[#allocation2 + $0x5e8] sm:$0xff]
    %v269 = vld [vmem:[#allocation2 + $0x5f0] sm:$0xff]
    %v270 = vld [vmem:[#allocation2 + $0x5f8] sm:$0xff]
    %v271 = vld [vmem:[#allocation2 + $0x600] sm:$0xff]
    %v272 = vld [vmem:[#allocation2 + $0x608] sm:$0xff]
    %v273 = vld [vmem:[#allocation2 + $0x610] sm:$0xff]
    %v274 = vld [vmem:[#allocation2 + $0x618] sm:$0xff]
    %v275 = vld [vmem:[#allocation2 + $0x620] sm:$0xff]
    %v276 = vld [vmem:[#allocation2 + $0x628] sm:$0xff]
    %v277 = vld [vmem:[#allocation2 + $0x630] sm:$0xff]
    %v278 = vld [vmem:[#allocation2 + $0x638] sm:$0xff]
    %v279 = vld [vmem:[#allocation2 + $0x640] sm:$0xff]
    %v280 = vld [vmem:[#allocation2 + $0x648] sm:$0xff]
    %v281 = vld [vmem:[#allocation2 + $0x650] sm:$0xff]
    %v282 = vld [vmem:[#allocation2 + $0x658] sm:$0xff]
    %v283 = vld [vmem:[#allocation2 + $0x660] sm:$0xff]
    %v284 = vld [vmem:[#allocation2 + $0x668] sm:$0xff]
    %v285 = vld [vmem:[#allocation2 + $0x670] sm:$0xff]
    %v286 = vld [vmem:[#allocation2 + $0x678] sm:$0xff]
    %v287 = vld [vmem:[#allocation2 + $0x680] sm:$0xff]
    %v288 = vld [vmem:[#allocation2 + $0x688] sm:$0xff]
    %v289 = vld [vmem:[#allocation2 + $0x690] sm:$0xff]
    %v290 = vld [vmem:[#allocation2 + $0x698] sm:$0xff]
    %v291 = vld [vmem:[#allocation2 + $0x6a0] sm:$0xff]
    %v292 = vld [vmem:[#allocation2 + $0x6a8] sm:$0xff]
    %v293 = vld [vmem:[#allocation2 + $0x6b0] sm:$0xff]
    %v294 = vld [vmem:[#allocation2 + $0x6b8] sm:$0xff]
    %v295 = vld [vmem:[#allocation2 + $0x6c0] sm:$0xff]
    %v296 = vld [vmem:[#allocation2 + $0x6c8] sm:$0xff]
    %v297 = vld [vmem:[#allocation2 + $0x6d0] sm:$0xff]
    %v298 = vld [vmem:[#allocation2 + $0x6d8] sm:$0xff]
    %v299 = vld [vmem:[#allocation2 + $0x6e0] sm:$0xff]
    %v300 = vld [vmem:[#allocation2 + $0x6e8] sm:$0xff]
    %v301 = vld [vmem:[#allocation2 + $0x6f0] sm:$0xff]
    %v302 = vld [vmem:[#allocation2 + $0x6f8] sm:$0xff]
    %v303 = vld [vmem:[%s2] sm:$0xf]
    %v305 = vperm.slane %v303, 0
    %v306 = vperm.slane %v303, 1
    %v307 = vperm.slane %v303, 2
    %v308 = vperm.slane %v303, 3
    %v537 = vunpack.c.l.b16 %v79
    %v538 = vunpack.c.h.b16 %v79
    %v539 = vunpack.c.l.b16 %v80
    %v540 = vunpack.c.h.b16 %v80
    %v541 = vunpack.c.l.b16 %v81
    %v542 = vunpack.c.h.b16 %v81
    %v543 = vunpack.c.l.b16 %v82
    %v544 = vunpack.c.h.b16 %v82
    %v545 = vunpack.c.l.b16 %v83
    %v546 = vunpack.c.h.b16 %v83
    %v547 = vunpack.c.l.b16 %v84
    %v548 = vunpack.c.h.b16 %v84
    %v549 = vunpack.c.l.b16 %v85
    %v550 = vunpack.c.h.b16 %v85
    %v551 = vunpack.c.l.b16 %v86
    %v552 = vunpack.c.h.b16 %v86
    %v553 = vunpack.c.l.b16 %v87
    %v554 = vunpack.c.h.b16 %v87
    %v555 = vunpack.c.l.b16 %v88
    %v556 = vunpack.c.h.b16 %v88
    %v557 = vunpack.c.l.b16 %v89
    %v558 = vunpack.c.h.b16 %v89
    %v559 = vunpack.c.l.b16 %v90
    %v560 = vunpack.c.h.b16 %v90
    %v561 = vunpack.c.l.b16 %v91
    %v562 = vunpack.c.h.b16 %v91
    %v563 = vunpack.c.l.b16 %v92
    %v564 = vunpack.c.h.b16 %v92
    %v565 = vunpack.c.l.b16 %v93
    %v566 = vunpack.c.h.b16 %v93
    %v567 = vunpack.c.l.b16 %v94
    %v568 = vunpack.c.h.b16 %v94
    %v569 = vunpack.c.l.b16 %v95
    %v570 = vunpack.c.h.b16 %v95
    %v571 = vunpack.c.l.b16 %v96
    %v572 = vunpack.c.h.b16 %v96
    %v573 = vunpack.c.l.b16 %v97
    %v574 = vunpack.c.h.b16 %v97
    %v575 = vunpack.c.l.b16 %v98
    %v576 = vunpack.c.h.b16 %v98
    %v577 = vunpack.c.l.b16 %v99
    %v578 = vunpack.c.h.b16 %v99
    %v579 = vunpack.c.l.b16 %v100
    %v580 = vunpack.c.h.b16 %v100
    %v581 = vunpack.c.l.b16 %v101
    %v582 = vunpack.c.h.b16 %v101
    %v583 = vunpack.c.l.b16 %v102
    %v584 = vunpack.c.h.b16 %v102
    %v585 = vunpack.c.l.b16 %v103
    %v586 = vunpack.c.h.b16 %v103
    %v587 = vunpack.c.l.b16 %v104
    %v588 = vunpack.c.h.b16 %v104
    %v589 = vunpack.c.l.b16 %v105
    %v590 = vunpack.c.h.b16 %v105
    %v591 = vunpack.c.l.b16 %v106
    %v592 = vunpack.c.h.b16 %v106
    %v593 = vunpack.c.l.b16 %v107
    %v594 = vunpack.c.h.b16 %v107
    %v595 = vunpack.c.l.b16 %v108
    %v596 = vunpack.c.h.b16 %v108
    %v597 = vunpack.c.l.b16 %v109
    %v598 = vunpack.c.h.b16 %v109
    %v599 = vunpack.c.l.b16 %v110
    %v600 = vunpack.c.h.b16 %v110
    %v601 = vunpack.c.l.b16 %v111
    %v602 = vunpack.c.h.b16 %v111
    %v603 = vunpack.c.l.b16 %v112
    %v604 = vunpack.c.h.b16 %v112
    %v605 = vunpack.c.l.b16 %v113
    %v606 = vunpack.c.h.b16 %v113
    %v607 = vunpack.c.l.b16 %v114
    %v608 = vunpack.c.h.b16 %v114
    %v609 = vunpack.c.l.b16 %v115
    %v610 = vunpack.c.h.b16 %v115
    %v611 = vunpack.c.l.b16 %v116
    %v612 = vunpack.c.h.b16 %v116
    %v613 = vunpack.c.l.b16 %v117
    %v614 = vunpack.c.h.b16 %v117
    %v615 = vunpack.c.l.b16 %v118
    %v616 = vunpack.c.h.b16 %v118
    %v617 = vunpack.c.l.b16 %v119
    %v618 = vunpack.c.h.b16 %v119
    %v619 = vunpack.c.l.b16 %v120
    %v620 = vunpack.c.h.b16 %v120
    %v621 = vunpack.c.l.b16 %v121
    %v622 = vunpack.c.h.b16 %v121
    %v623 = vunpack.c.l.b16 %v122
    %v624 = vunpack.c.h.b16 %v122
    %v625 = vunpack.c.l.b16 %v123
    %v626 = vunpack.c.h.b16 %v123
    %v627 = vunpack.c.l.b16 %v124
    %v628 = vunpack.c.h.b16 %v124
    %v629 = vunpack.c.l.b16 %v125
    %v630 = vunpack.c.h.b16 %v125
    %v631 = vunpack.c.l.b16 %v126
    %v632 = vunpack.c.h.b16 %v126
    %v633 = vunpack.c.l.b16 %v127
    %v634 = vunpack.c.h.b16 %v127
    %v635 = vunpack.c.l.b16 %v128
    %v636 = vunpack.c.h.b16 %v128
    %v637 = vunpack.c.l.b16 %v129
    %v638 = vunpack.c.h.b16 %v129
    %v639 = vunpack.c.l.b16 %v130
    %v640 = vunpack.c.h.b16 %v130
    %v641 = vunpack.c.l.b16 %v131
    %v642 = vunpack.c.h.b16 %v131
    %v643 = vunpack.c.l.b16 %v132
    %v644 = vunpack.c.h.b16 %v132
    %v645 = vunpack.c.l.b16 %v133
    %v646 = vunpack.c.h.b16 %v133
    %v647 = vunpack.c.l.b16 %v134
    %v648 = vunpack.c.h.b16 %v134
    %v649 = vunpack.c.l.b16 %v135
    %v650 = vunpack.c.h.b16 %v135
    %v651 = vunpack.c.l.b16 %v136
    %v652 = vunpack.c.h.b16 %v136
    %v653 = vunpack.c.l.b16 %v137
    %v654 = vunpack.c.h.b16 %v137
    %v655 = vunpack.c.l.b16 %v138
    %v656 = vunpack.c.h.b16 %v138
    %v657 = vunpack.c.l.b16 %v139
    %v658 = vunpack.c.h.b16 %v139
    %v659 = vunpack.c.l.b16 %v140
    %v660 = vunpack.c.h.b16 %v140
    %v661 = vunpack.c.l.b16 %v141
    %v662 = vunpack.c.h.b16 %v141
    %v663 = vunpack.c.l.b16 %v142
    %v664 = vunpack.c.h.b16 %v142
    %v665 = vunpack.c.l.b16 %v143
    %v666 = vunpack.c.h.b16 %v143
    %v667 = vunpack.c.l.b16 %v144
    %v668 = vunpack.c.h.b16 %v144
    %v669 = vunpack.c.l.b16 %v145
    %v670 = vunpack.c.h.b16 %v145
    %v671 = vunpack.c.l.b16 %v146
    %v672 = vunpack.c.h.b16 %v146
    %v673 = vunpack.c.l.b16 %v147
    %v674 = vunpack.c.h.b16 %v147
    %v675 = vunpack.c.l.b16 %v148
    %v676 = vunpack.c.h.b16 %v148
    %v677 = vunpack.c.l.b16 %v149
    %v678 = vunpack.c.h.b16 %v149
    %v679 = vunpack.c.l.b16 %v150
    %v680 = vunpack.c.h.b16 %v150
    %v681 = vunpack.c.l.b16 %v151
    %v682 = vunpack.c.h.b16 %v151
    %v683 = vunpack.c.l.b16 %v152
    %v684 = vunpack.c.h.b16 %v152
    %v685 = vunpack.c.l.b16 %v153
    %v686 = vunpack.c.h.b16 %v153
    %v687 = vunpack.c.l.b16 %v154
    %v688 = vunpack.c.h.b16 %v154
    %v689 = vunpack.c.l.b16 %v155
    %v690 = vunpack.c.h.b16 %v155
    %v691 = vunpack.c.l.b16 %v156
    %v692 = vunpack.c.h.b16 %v156
    %v693 = vunpack.c.l.b16 %v157
    %v694 = vunpack.c.h.b16 %v157
    %v695 = vunpack.c.l.b16 %v158
    %v696 = vunpack.c.h.b16 %v158
    %v697 = vunpack.c.l.b16 %v159
    %v698 = vunpack.c.h.b16 %v159
    %v699 = vunpack.c.l.b16 %v160
    %v700 = vunpack.c.h.b16 %v160
    %v701 = vunpack.c.l.b16 %v161
    %v702 = vunpack.c.h.b16 %v161
    %v703 = vunpack.c.l.b16 %v162
    %v704 = vunpack.c.h.b16 %v162
    %v705 = vunpack.c.l.b16 %v163
    %v706 = vunpack.c.h.b16 %v163
    %v707 = vunpack.c.l.b16 %v164
    %v708 = vunpack.c.h.b16 %v164
    %v709 = vunpack.c.l.b16 %v165
    %v710 = vunpack.c.h.b16 %v165
    %v711 = vunpack.c.l.b16 %v166
    %v712 = vunpack.c.h.b16 %v166
    %v713 = vunpack.c.l.b16 %v167
    %v714 = vunpack.c.h.b16 %v167
    %v715 = vunpack.c.l.b16 %v168
    %v716 = vunpack.c.h.b16 %v168
    %v717 = vunpack.c.l.b16 %v169
    %v718 = vunpack.c.h.b16 %v169
    %v719 = vunpack.c.l.b16 %v170
    %v720 = vunpack.c.h.b16 %v170
    %v721 = vunpack.c.l.b16 %v171
    %v722 = vunpack.c.h.b16 %v171
    %v723 = vunpack.c.l.b16 %v172
    %v724 = vunpack.c.h.b16 %v172
    %v725 = vunpack.c.l.b16 %v173
    %v726 = vunpack.c.h.b16 %v173
    %v727 = vunpack.c.l.b16 %v174
    %v728 = vunpack.c.h.b16 %v174
    %v729 = vunpack.c.l.b16 %v175
    %v730 = vunpack.c.h.b16 %v175
    %v731 = vunpack.c.l.b16 %v176
    %v732 = vunpack.c.h.b16 %v176
    %v733 = vunpack.c.l.b16 %v177
    %v734 = vunpack.c.h.b16 %v177
    %v735 = vunpack.c.l.b16 %v178
    %v736 = vunpack.c.h.b16 %v178
    %v737 = vunpack.c.l.b16 %v179
    %v738 = vunpack.c.h.b16 %v179
    %v739 = vunpack.c.l.b16 %v180
    %v740 = vunpack.c.h.b16 %v180
    %v741 = vunpack.c.l.b16 %v181
    %v742 = vunpack.c.h.b16 %v181
    %v743 = vunpack.c.l.b16 %v182
    %v744 = vunpack.c.h.b16 %v182
    %v745 = vunpack.c.l.b16 %v183
    %v746 = vunpack.c.h.b16 %v183
    %v747 = vunpack.c.l.b16 %v184
    %v748 = vunpack.c.h.b16 %v184
    %v749 = vunpack.c.l.b16 %v185
    %v750 = vunpack.c.h.b16 %v185
    %v751 = vunpack.c.l.b16 %v186
    %v752 = vunpack.c.h.b16 %v186
    %v753 = vunpack.c.l.b16 %v187
    %v754 = vunpack.c.h.b16 %v187
    %v755 = vunpack.c.l.b16 %v188
    %v756 = vunpack.c.h.b16 %v188
    %v757 = vunpack.c.l.b16 %v189
    %v758 = vunpack.c.h.b16 %v189
    %v759 = vunpack.c.l.b16 %v190
    %v760 = vunpack.c.h.b16 %v190
    %v761 = vunpack.c.l.b16 %v191
    %v762 = vunpack.c.h.b16 %v191
    %v763 = vunpack.c.l.b16 %v192
    %v764 = vunpack.c.h.b16 %v192
    %v765 = vunpack.c.l.b16 %v193
    %v766 = vunpack.c.h.b16 %v193
    %v767 = vunpack.c.l.b16 %v194
    %v768 = vunpack.c.h.b16 %v194
    %v769 = vunpack.c.l.b16 %v195
    %v770 = vunpack.c.h.b16 %v195
    %v771 = vunpack.c.l.b16 %v196
    %v772 = vunpack.c.h.b16 %v196
    %v773 = vunpack.c.l.b16 %v197
    %v774 = vunpack.c.h.b16 %v197
    %v775 = vunpack.c.l.b16 %v198
    %v776 = vunpack.c.h.b16 %v198
    %v777 = vunpack.c.l.b16 %v199
    %v778 = vunpack.c.h.b16 %v199
    %v779 = vunpack.c.l.b16 %v200
    %v780 = vunpack.c.h.b16 %v200
    %v781 = vunpack.c.l.b16 %v201
    %v782 = vunpack.c.h.b16 %v201
    %v783 = vunpack.c.l.b16 %v202
    %v784 = vunpack.c.h.b16 %v202
    %v785 = vunpack.c.l.b16 %v203
    %v786 = vunpack.c.h.b16 %v203
    %v787 = vunpack.c.l.b16 %v204
    %v788 = vunpack.c.h.b16 %v204
    %v789 = vunpack.c.l.b16 %v205
    %v790 = vunpack.c.h.b16 %v205
    %v791 = vunpack.c.l.b16 %v206
    %v792 = vunpack.c.h.b16 %v206
    %v793 = vunpack.c.l.b16 %v207
    %v794 = vunpack.c.h.b16 %v207
    %v795 = vunpack.c.l.b16 %v208
    %v796 = vunpack.c.h.b16 %v208
    %v797 = vunpack.c.l.b16 %v209
    %v798 = vunpack.c.h.b16 %v209
    %v799 = vunpack.c.l.b16 %v210
    %v800 = vunpack.c.h.b16 %v210
    %v801 = vunpack.c.l.b16 %v211
    %v802 = vunpack.c.h.b16 %v211
    %v803 = vunpack.c.l.b16 %v212
    %v804 = vunpack.c.h.b16 %v212
    %v805 = vunpack.c.l.b16 %v213
    %v806 = vunpack.c.h.b16 %v213
    %v807 = vunpack.c.l.b16 %v214
    %v808 = vunpack.c.h.b16 %v214
    %v809 = vunpack.c.l.b16 %v215
    %v810 = vunpack.c.h.b16 %v215
    %v811 = vunpack.c.l.b16 %v216
    %v812 = vunpack.c.h.b16 %v216
    %v813 = vunpack.c.l.b16 %v217
    %v814 = vunpack.c.h.b16 %v217
    %v815 = vunpack.c.l.b16 %v218
    %v816 = vunpack.c.h.b16 %v218
    %v817 = vunpack.c.l.b16 %v219
    %v818 = vunpack.c.h.b16 %v219
    %v819 = vunpack.c.l.b16 %v220
    %v820 = vunpack.c.h.b16 %v220
    %v821 = vunpack.c.l.b16 %v221
    %v822 = vunpack.c.h.b16 %v221
    %v823 = vunpack.c.l.b16 %v222
    %v824 = vunpack.c.h.b16 %v222
    %v825 = vunpack.c.l.b16 %v223
    %v826 = vunpack.c.h.b16 %v223
    %v827 = vunpack.c.l.b16 %v224
    %v828 = vunpack.c.h.b16 %v224
    %v829 = vunpack.c.l.b16 %v225
    %v830 = vunpack.c.h.b16 %v225
    %v831 = vunpack.c.l.b16 %v226
    %v832 = vunpack.c.h.b16 %v226
    %v833 = vunpack.c.l.b16 %v227
    %v834 = vunpack.c.h.b16 %v227
    %v835 = vunpack.c.l.b16 %v228
    %v836 = vunpack.c.h.b16 %v228
    %v837 = vunpack.c.l.b16 %v229
    %v838 = vunpack.c.h.b16 %v229
    %v839 = vunpack.c.l.b16 %v230
    %v840 = vunpack.c.h.b16 %v230
    %v841 = vunpack.c.l.b16 %v231
    %v842 = vunpack.c.h.b16 %v231
    %v843 = vunpack.c.l.b16 %v232
    %v844 = vunpack.c.h.b16 %v232
    %v845 = vunpack.c.l.b16 %v233
    %v846 = vunpack.c.h.b16 %v233
    %v847 = vunpack.c.l.b16 %v234
    %v848 = vunpack.c.h.b16 %v234
    %v849 = vunpack.c.l.b16 %v235
    %v850 = vunpack.c.h.b16 %v235
    %v851 = vunpack.c.l.b16 %v236
    %v852 = vunpack.c.h.b16 %v236
    %v853 = vunpack.c.l.b16 %v237
    %v854 = vunpack.c.h.b16 %v237
    %v855 = vunpack.c.l.b16 %v238
    %v856 = vunpack.c.h.b16 %v238
    %v857 = vunpack.c.l.b16 %v239
    %v858 = vunpack.c.h.b16 %v239
    %v859 = vunpack.c.l.b16 %v240
    %v860 = vunpack.c.h.b16 %v240
    %v861 = vunpack.c.l.b16 %v241
    %v862 = vunpack.c.h.b16 %v241
    %v863 = vunpack.c.l.b16 %v242
    %v864 = vunpack.c.h.b16 %v242
    %v865 = vunpack.c.l.b16 %v243
    %v866 = vunpack.c.h.b16 %v243
    %v867 = vunpack.c.l.b16 %v244
    %v868 = vunpack.c.h.b16 %v244
    %v869 = vunpack.c.l.b16 %v245
    %v870 = vunpack.c.h.b16 %v245
    %v871 = vunpack.c.l.b16 %v246
    %v872 = vunpack.c.h.b16 %v246
    %v873 = vunpack.c.l.b16 %v247
    %v874 = vunpack.c.h.b16 %v247
    %v875 = vunpack.c.l.b16 %v248
    %v876 = vunpack.c.h.b16 %v248
    %v877 = vunpack.c.l.b16 %v249
    %v878 = vunpack.c.h.b16 %v249
    %v879 = vunpack.c.l.b16 %v250
    %v880 = vunpack.c.h.b16 %v250
    %v881 = vunpack.c.l.b16 %v251
    %v882 = vunpack.c.h.b16 %v251
    %v883 = vunpack.c.l.b16 %v252
    %v884 = vunpack.c.h.b16 %v252
    %v885 = vunpack.c.l.b16 %v253
    %v886 = vunpack.c.h.b16 %v253
    %v887 = vunpack.c.l.b16 %v254
    %v888 = vunpack.c.h.b16 %v254
    %v889 = vunpack.c.l.b16 %v255
    %v890 = vunpack.c.h.b16 %v255
    %v891 = vunpack.c.l.b16 %v256
    %v892 = vunpack.c.h.b16 %v256
    %v893 = vunpack.c.l.b16 %v257
    %v894 = vunpack.c.h.b16 %v257
    %v895 = vunpack.c.l.b16 %v258
    %v896 = vunpack.c.h.b16 %v258
    %v897 = vunpack.c.l.b16 %v259
    %v898 = vunpack.c.h.b16 %v259
    %v899 = vunpack.c.l.b16 %v260
    %v900 = vunpack.c.h.b16 %v260
    %v901 = vunpack.c.l.b16 %v261
    %v902 = vunpack.c.h.b16 %v261
    %v903 = vunpack.c.l.b16 %v262
    %v904 = vunpack.c.h.b16 %v262
    %v905 = vunpack.c.l.b16 %v263
    %v906 = vunpack.c.h.b16 %v263
    %v907 = vunpack.c.l.b16 %v264
    %v908 = vunpack.c.h.b16 %v264
    %v909 = vunpack.c.l.b16 %v265
    %v910 = vunpack.c.h.b16 %v265
    %v911 = vunpack.c.l.b16 %v266
    %v912 = vunpack.c.h.b16 %v266
    %v913 = vunpack.c.l.b16 %v267
    %v914 = vunpack.c.h.b16 %v267
    %v915 = vunpack.c.l.b16 %v268
    %v916 = vunpack.c.h.b16 %v268
    %v917 = vunpack.c.l.b16 %v269
    %v918 = vunpack.c.h.b16 %v269
    %v919 = vunpack.c.l.b16 %v270
    %v920 = vunpack.c.h.b16 %v270
    %v921 = vunpack.c.l.b16 %v271
    %v922 = vunpack.c.h.b16 %v271
    %v923 = vunpack.c.l.b16 %v272
    %v924 = vunpack.c.h.b16 %v272
    %v925 = vunpack.c.l.b16 %v273
    %v926 = vunpack.c.h.b16 %v273
    %v927 = vunpack.c.l.b16 %v274
    %v928 = vunpack.c.h.b16 %v274
    %v929 = vunpack.c.l.b16 %v275
    %v930 = vunpack.c.h.b16 %v275
    %v931 = vunpack.c.l.b16 %v276
    %v932 = vunpack.c.h.b16 %v276
    %v933 = vunpack.c.l.b16 %v277
    %v934 = vunpack.c.h.b16 %v277
    %v935 = vunpack.c.l.b16 %v278
    %v936 = vunpack.c.h.b16 %v278
    %v937 = vunpack.c.l.b16 %v279
    %v938 = vunpack.c.h.b16 %v279
    %v939 = vunpack.c.l.b16 %v280
    %v940 = vunpack.c.h.b16 %v280
    %v941 = vunpack.c.l.b16 %v281
    %v942 = vunpack.c.h.b16 %v281
    %v943 = vunpack.c.l.b16 %v282
    %v944 = vunpack.c.h.b16 %v282
    %v945 = vunpack.c.l.b16 %v283
    %v946 = vunpack.c.h.b16 %v283
    %v947 = vunpack.c.l.b16 %v284
    %v948 = vunpack.c.h.b16 %v284
    %v949 = vunpack.c.l.b16 %v285
    %v950 = vunpack.c.h.b16 %v285
    %v951 = vunpack.c.l.b16 %v286
    %v952 = vunpack.c.h.b16 %v286
    %v953 = vunpack.c.l.b16 %v287
    %v954 = vunpack.c.h.b16 %v287
    %v955 = vunpack.c.l.b16 %v288
    %v956 = vunpack.c.h.b16 %v288
    %v957 = vunpack.c.l.b16 %v289
    %v958 = vunpack.c.h.b16 %v289
    %v959 = vunpack.c.l.b16 %v290
    %v960 = vunpack.c.h.b16 %v290
    %v961 = vunpack.c.l.b16 %v291
    %v962 = vunpack.c.h.b16 %v291
    %v963 = vunpack.c.l.b16 %v292
    %v964 = vunpack.c.h.b16 %v292
    %v965 = vunpack.c.l.b16 %v293
    %v966 = vunpack.c.h.b16 %v293
    %v967 = vunpack.c.l.b16 %v294
    %v968 = vunpack.c.h.b16 %v294
    %v969 = vunpack.c.l.b16 %v295
    %v970 = vunpack.c.h.b16 %v295
    %v971 = vunpack.c.l.b16 %v296
    %v972 = vunpack.c.h.b16 %v296
    %v973 = vunpack.c.l.b16 %v297
    %v974 = vunpack.c.h.b16 %v297
    %v975 = vunpack.c.l.b16 %v298
    %v976 = vunpack.c.h.b16 %v298
    %v977 = vunpack.c.l.b16 %v299
    %v978 = vunpack.c.h.b16 %v299
    %v979 = vunpack.c.l.b16 %v300
    %v980 = vunpack.c.h.b16 %v300
    %v981 = vunpack.c.l.b16 %v301
    %v982 = vunpack.c.h.b16 %v301
    %v983 = vunpack.c.l.b16 %v302
    %v984 = vunpack.c.h.b16 %v302
    %v985 = vpack.c.b16 %v541, %v537
    %v986 = vpack.c.b16 %v542, %v538
    %v987 = vpack.c.b16 %v543, %v539
    %v988 = vpack.c.b16 %v544, %v540
    %v989 = vpack.c.b16 %v549, %v545
    %v990 = vpack.c.b16 %v550, %v546
    %v991 = vpack.c.b16 %v551, %v547
    %v992 = vpack.c.b16 %v552, %v548
    %v993 = vpack.c.b16 %v557, %v553
    %v994 = vpack.c.b16 %v558, %v554
    %v995 = vpack.c.b16 %v559, %v555
    %v996 = vpack.c.b16 %v560, %v556
    %v997 = vpack.c.b16 %v565, %v561
    %v998 = vpack.c.b16 %v566, %v562
    %v999 = vpack.c.b16 %v567, %v563
    %v1000 = vpack.c.b16 %v568, %v564
    %v1001 = vpack.c.b16 %v573, %v569
    %v1002 = vpack.c.b16 %v574, %v570
    %v1003 = vpack.c.b16 %v575, %v571
    %v1004 = vpack.c.b16 %v576, %v572
    %v1005 = vpack.c.b16 %v581, %v577
    %v1006 = vpack.c.b16 %v582, %v578
    %v1007 = vpack.c.b16 %v583, %v579
    %v1008 = vpack.c.b16 %v584, %v580
    %v1009 = vpack.c.b16 %v589, %v585
    %v1010 = vpack.c.b16 %v590, %v586
    %v1011 = vpack.c.b16 %v591, %v587
    %v1012 = vpack.c.b16 %v592, %v588
    %v1013 = vpack.c.b16 %v597, %v593
    %v1014 = vpack.c.b16 %v598, %v594
    %v1015 = vpack.c.b16 %v599, %v595
    %v1016 = vpack.c.b16 %v600, %v596
    %v1017 = vpack.c.b16 %v605, %v601
    %v1018 = vpack.c.b16 %v606, %v602
    %v1019 = vpack.c.b16 %v607, %v603
    %v1020 = vpack.c.b16 %v608, %v604
    %v1021 = vpack.c.b16 %v613, %v609
    %v1022 = vpack.c.b16 %v614, %v610
    %v1023 = vpack.c.b16 %v615, %v611
    %v1024 = vpack.c.b16 %v616, %v612
    %v1025 = vpack.c.b16 %v621, %v617
    %v1026 = vpack.c.b16 %v622, %v618
    %v1027 = vpack.c.b16 %v623, %v619
    %v1028 = vpack.c.b16 %v624, %v620
    %v1029 = vpack.c.b16 %v629, %v625
    %v1030 = vpack.c.b16 %v630, %v626
    %v1031 = vpack.c.b16 %v631, %v627
    %v1032 = vpack.c.b16 %v632, %v628
    %v1033 = vpack.c.b16 %v637, %v633
    %v1034 = vpack.c.b16 %v638, %v634
    %v1035 = vpack.c.b16 %v639, %v635
    %v1036 = vpack.c.b16 %v640, %v636
    %v1037 = vpack.c.b16 %v645, %v641
    %v1038 = vpack.c.b16 %v646, %v642
    %v1039 = vpack.c.b16 %v647, %v643
    %v1040 = vpack.c.b16 %v648, %v644
    %v1041 = vpack.c.b16 %v653, %v649
    %v1042 = vpack.c.b16 %v654, %v650
    %v1043 = vpack.c.b16 %v655, %v651
    %v1044 = vpack.c.b16 %v656, %v652
    %v1045 = vpack.c.b16 %v661, %v657
    %v1046 = vpack.c.b16 %v662, %v658
    %v1047 = vpack.c.b16 %v663, %v659
    %v1048 = vpack.c.b16 %v664, %v660
    %v1049 = vpack.c.b16 %v669, %v665
    %v1050 = vpack.c.b16 %v670, %v666
    %v1051 = vpack.c.b16 %v671, %v667
    %v1052 = vpack.c.b16 %v672, %v668
    %v1053 = vpack.c.b16 %v677, %v673
    %v1054 = vpack.c.b16 %v678, %v674
    %v1055 = vpack.c.b16 %v679, %v675
    %v1056 = vpack.c.b16 %v680, %v676
    %v1057 = vpack.c.b16 %v685, %v681
    %v1058 = vpack.c.b16 %v686, %v682
    %v1059 = vpack.c.b16 %v687, %v683
    %v1060 = vpack.c.b16 %v688, %v684
    %v1061 = vpack.c.b16 %v693, %v689
    %v1062 = vpack.c.b16 %v694, %v690
    %v1063 = vpack.c.b16 %v695, %v691
    %v1064 = vpack.c.b16 %v696, %v692
    %v1065 = vpack.c.b16 %v701, %v697
    %v1066 = vpack.c.b16 %v702, %v698
    %v1067 = vpack.c.b16 %v703, %v699
    %v1068 = vpack.c.b16 %v704, %v700
    %v1069 = vpack.c.b16 %v709, %v705
    %v1070 = vpack.c.b16 %v710, %v706
    %v1071 = vpack.c.b16 %v711, %v707
    %v1072 = vpack.c.b16 %v712, %v708
    %v1073 = vpack.c.b16 %v717, %v713
    %v1074 = vpack.c.b16 %v718, %v714
    %v1075 = vpack.c.b16 %v719, %v715
    %v1076 = vpack.c.b16 %v720, %v716
    %v1077 = vpack.c.b16 %v725, %v721
    %v1078 = vpack.c.b16 %v726, %v722
    %v1079 = vpack.c.b16 %v727, %v723
    %v1080 = vpack.c.b16 %v728, %v724
    %v1081 = vpack.c.b16 %v733, %v729
    %v1082 = vpack.c.b16 %v734, %v730
    %v1083 = vpack.c.b16 %v735, %v731
    %v1084 = vpack.c.b16 %v736, %v732
    %v1085 = vpack.c.b16 %v741, %v737
    %v1086 = vpack.c.b16 %v742, %v738
    %v1087 = vpack.c.b16 %v743, %v739
    %v1088 = vpack.c.b16 %v744, %v740
    %v1089 = vpack.c.b16 %v749, %v745
    %v1090 = vpack.c.b16 %v750, %v746
    %v1091 = vpack.c.b16 %v751, %v747
    %v1092 = vpack.c.b16 %v752, %v748
    %v1093 = vpack.c.b16 %v757, %v753
    %v1094 = vpack.c.b16 %v758, %v754
    %v1095 = vpack.c.b16 %v759, %v755
    %v1096 = vpack.c.b16 %v760, %v756
    %v1097 = vpack.c.b16 %v765, %v761
    %v1098 = vpack.c.b16 %v766, %v762
    %v1099 = vpack.c.b16 %v767, %v763
    %v1100 = vpack.c.b16 %v768, %v764
    %v1101 = vpack.c.b16 %v773, %v769
    %v1102 = vpack.c.b16 %v774, %v770
    %v1103 = vpack.c.b16 %v775, %v771
    %v1104 = vpack.c.b16 %v776, %v772
    %v1105 = vpack.c.b16 %v781, %v777
    %v1106 = vpack.c.b16 %v782, %v778
    %v1107 = vpack.c.b16 %v783, %v779
    %v1108 = vpack.c.b16 %v784, %v780
    %v1109 = vpack.c.b16 %v789, %v785
    %v1110 = vpack.c.b16 %v790, %v786
    %v1111 = vpack.c.b16 %v791, %v787
    %v1112 = vpack.c.b16 %v792, %v788
    %v1113 = vpack.c.b16 %v797, %v793
    %v1114 = vpack.c.b16 %v798, %v794
    %v1115 = vpack.c.b16 %v799, %v795
    %v1116 = vpack.c.b16 %v800, %v796
    %v1117 = vpack.c.b16 %v805, %v801
    %v1118 = vpack.c.b16 %v806, %v802
    %v1119 = vpack.c.b16 %v807, %v803
    %v1120 = vpack.c.b16 %v808, %v804
    %v1121 = vpack.c.b16 %v813, %v809
    %v1122 = vpack.c.b16 %v814, %v810
    %v1123 = vpack.c.b16 %v815, %v811
    %v1124 = vpack.c.b16 %v816, %v812
    %v1125 = vpack.c.b16 %v821, %v817
    %v1126 = vpack.c.b16 %v822, %v818
    %v1127 = vpack.c.b16 %v823, %v819
    %v1128 = vpack.c.b16 %v824, %v820
    %v1129 = vpack.c.b16 %v829, %v825
    %v1130 = vpack.c.b16 %v830, %v826
    %v1131 = vpack.c.b16 %v831, %v827
    %v1132 = vpack.c.b16 %v832, %v828
    %v1133 = vpack.c.b16 %v837, %v833
    %v1134 = vpack.c.b16 %v838, %v834
    %v1135 = vpack.c.b16 %v839, %v835
    %v1136 = vpack.c.b16 %v840, %v836
    %v1137 = vpack.c.b16 %v845, %v841
    %v1138 = vpack.c.b16 %v846, %v842
    %v1139 = vpack.c.b16 %v847, %v843
    %v1140 = vpack.c.b16 %v848, %v844
    %v1141 = vpack.c.b16 %v853, %v849
    %v1142 = vpack.c.b16 %v854, %v850
    %v1143 = vpack.c.b16 %v855, %v851
    %v1144 = vpack.c.b16 %v856, %v852
    %v1145 = vpack.c.b16 %v861, %v857
    %v1146 = vpack.c.b16 %v862, %v858
    %v1147 = vpack.c.b16 %v863, %v859
    %v1148 = vpack.c.b16 %v864, %v860
    %v1149 = vpack.c.b16 %v869, %v865
    %v1150 = vpack.c.b16 %v870, %v866
    %v1151 = vpack.c.b16 %v871, %v867
    %v1152 = vpack.c.b16 %v872, %v868
    %v1153 = vpack.c.b16 %v877, %v873
    %v1154 = vpack.c.b16 %v878, %v874
    %v1155 = vpack.c.b16 %v879, %v875
    %v1156 = vpack.c.b16 %v880, %v876
    %v1157 = vpack.c.b16 %v885, %v881
    %v1158 = vpack.c.b16 %v886, %v882
    %v1159 = vpack.c.b16 %v887, %v883
    %v1160 = vpack.c.b16 %v888, %v884
    %v1161 = vpack.c.b16 %v893, %v889
    %v1162 = vpack.c.b16 %v894, %v890
    %v1163 = vpack.c.b16 %v895, %v891
    %v1164 = vpack.c.b16 %v896, %v892
    %v1165 = vpack.c.b16 %v901, %v897
    %v1166 = vpack.c.b16 %v902, %v898
    %v1167 = vpack.c.b16 %v903, %v899
    %v1168 = vpack.c.b16 %v904, %v900
    %v1169 = vpack.c.b16 %v909, %v905
    %v1170 = vpack.c.b16 %v910, %v906
    %v1171 = vpack.c.b16 %v911, %v907
    %v1172 = vpack.c.b16 %v912, %v908
    %v1173 = vpack.c.b16 %v917, %v913
    %v1174 = vpack.c.b16 %v918, %v914
    %v1175 = vpack.c.b16 %v919, %v915
    %v1176 = vpack.c.b16 %v920, %v916
    %v1177 = vpack.c.b16 %v925, %v921
    %v1178 = vpack.c.b16 %v926, %v922
    %v1179 = vpack.c.b16 %v927, %v923
    %v1180 = vpack.c.b16 %v928, %v924
    %v1181 = vpack.c.b16 %v933, %v929
    %v1182 = vpack.c.b16 %v934, %v930
    %v1183 = vpack.c.b16 %v935, %v931
    %v1184 = vpack.c.b16 %v936, %v932
    %v1185 = vpack.c.b16 %v941, %v937
    %v1186 = vpack.c.b16 %v942, %v938
    %v1187 = vpack.c.b16 %v943, %v939
    %v1188 = vpack.c.b16 %v944, %v940
    %v1189 = vpack.c.b16 %v949, %v945
    %v1190 = vpack.c.b16 %v950, %v946
    %v1191 = vpack.c.b16 %v951, %v947
    %v1192 = vpack.c.b16 %v952, %v948
    %v1193 = vpack.c.b16 %v957, %v953
    %v1194 = vpack.c.b16 %v958, %v954
    %v1195 = vpack.c.b16 %v959, %v955
    %v1196 = vpack.c.b16 %v960, %v956
    %v1197 = vpack.c.b16 %v965, %v961
    %v1198 = vpack.c.b16 %v966, %v962
    %v1199 = vpack.c.b16 %v967, %v963
    %v1200 = vpack.c.b16 %v968, %v964
    %v1201 = vpack.c.b16 %v973, %v969
    %v1202 = vpack.c.b16 %v974, %v970
    %v1203 = vpack.c.b16 %v975, %v971
    %v1204 = vpack.c.b16 %v976, %v972
    %v1205 = vpack.c.b16 %v981, %v977
    %v1206 = vpack.c.b16 %v982, %v978
    %v1207 = vpack.c.b16 %v983, %v979
    %v1208 = vpack.c.b16 %v984, %v980
    %1433 = vmatpush.bf16.msra.mxu0 %v1013
    %1434 = vmatpush.bf16.msra.mxu0 %v1009
    %1435 = vmatpush.bf16.msra.mxu0 %v1005
    %1436 = vmatpush.bf16.msra.mxu0 %v1001
    %1437 = vmatpush.bf16.msra.mxu0 %v997
    %1438 = vmatpush.bf16.msra.mxu0 %v993
    %1439 = vmatpush.bf16.msra.mxu0 %v989
    %1440 = vmatpush.bf16.msra.mxu0 %v985
    %1441 = vmatmul.bf16.gmra.mxu0 %v72
    %v1442 = vpop.f32.mrf.mxu0
    %v1443 = vadd.f32 %v305, %v1442
    %v1444 = vpop.f32.mrf.mxu0
    %v1445 = vadd.f32 %v305, %v1444
    %1446 = vdwg.mxu0
    %1447 = vmatpush.bf16.msra.mxu0 %v1045
    %1448 = vmatpush.bf16.msra.mxu0 %v1041
    %1449 = vmatpush.bf16.msra.mxu0 %v1037
    %1450 = vmatpush.bf16.msra.mxu0 %v1033
    %1451 = vmatpush.bf16.msra.mxu0 %v1029
    %1452 = vmatpush.bf16.msra.mxu0 %v1025
    %1453 = vmatpush.bf16.msra.mxu0 %v1021
    %1454 = vmatpush.bf16.msra.mxu0 %v1017
    %1455 = vmatmul.bf16.gmra.mxu0 %v73
    %v1456 = vpop.f32.mrf.mxu0
    %v1457 = vadd.f32 %v1443, %v1456
    %v1458 = vpop.f32.mrf.mxu0
    %v1459 = vadd.f32 %v1445, %v1458
    %1460 = vdwg.mxu0
    %1461 = vmatpush.bf16.msra.mxu0 %v1077
    %1462 = vmatpush.bf16.msra.mxu0 %v1073
    %1463 = vmatpush.bf16.msra.mxu0 %v1069
    %1464 = vmatpush.bf16.msra.mxu0 %v1065
    %1465 = vmatpush.bf16.msra.mxu0 %v1061
    %1466 = vmatpush.bf16.msra.mxu0 %v1057
    %1467 = vmatpush.bf16.msra.mxu0 %v1053
    %1468 = vmatpush.bf16.msra.mxu0 %v1049
    %1469 = vmatmul.bf16.gmra.mxu0 %v74
    %v1470 = vpop.f32.mrf.mxu0
    %v1471 = vadd.f32 %v1457, %v1470
    %v1472 = vpop.f32.mrf.mxu0
    %v1473 = vadd.f32 %v1459, %v1472
    %1474 = vdwg.mxu0
    %1475 = vmatpush.bf16.msra.mxu0 %v1109
    %1476 = vmatpush.bf16.msra.mxu0 %v1105
    %1477 = vmatpush.bf16.msra.mxu0 %v1101
    %1478 = vmatpush.bf16.msra.mxu0 %v1097
    %1479 = vmatpush.bf16.msra.mxu0 %v1093
    %1480 = vmatpush.bf16.msra.mxu0 %v1089
    %1481 = vmatpush.bf16.msra.mxu0 %v1085
    %1482 = vmatpush.bf16.msra.mxu0 %v1081
    %1483 = vmatmul.bf16.gmra.mxu0 %v75
    %v1484 = vpop.f32.mrf.mxu0
    %v1485 = vadd.f32 %v1471, %v1484
    %v1486 = vpop.f32.mrf.mxu0
    %v1487 = vadd.f32 %v1473, %v1486
    %1488 = vdwg.mxu0
    %1489 = vmatpush.bf16.msra.mxu0 %v1141
    %1490 = vmatpush.bf16.msra.mxu0 %v1137
    %1491 = vmatpush.bf16.msra.mxu0 %v1133
    %1492 = vmatpush.bf16.msra.mxu0 %v1129
    %1493 = vmatpush.bf16.msra.mxu0 %v1125
    %1494 = vmatpush.bf16.msra.mxu0 %v1121
    %1495 = vmatpush.bf16.msra.mxu0 %v1117
    %1496 = vmatpush.bf16.msra.mxu0 %v1113
    %1497 = vmatmul.bf16.gmra.mxu0 %v76
    %v1498 = vpop.f32.mrf.mxu0
    %v1499 = vadd.f32 %v1485, %v1498
    %v1500 = vpop.f32.mrf.mxu0
    %v1501 = vadd.f32 %v1487, %v1500
    %1502 = vdwg.mxu0
    %1503 = vmatpush.bf16.msra.mxu0 %v1173
    %1504 = vmatpush.bf16.msra.mxu0 %v1169
    %1505 = vmatpush.bf16.msra.mxu0 %v1165
    %1506 = vmatpush.bf16.msra.mxu0 %v1161
    %1507 = vmatpush.bf16.msra.mxu0 %v1157
    %1508 = vmatpush.bf16.msra.mxu0 %v1153
    %1509 = vmatpush.bf16.msra.mxu0 %v1149
    %1510 = vmatpush.bf16.msra.mxu0 %v1145
    %1511 = vmatmul.bf16.gmra.mxu0 %v77
    %v1512 = vpop.f32.mrf.mxu0
    %v1513 = vadd.f32 %v1499, %v1512
    %v1514 = vpop.f32.mrf.mxu0
    %v1515 = vadd.f32 %v1501, %v1514
    %1516 = vdwg.mxu0
    %1517 = vmatpush.bf16.msra.mxu0 %v1205
    %1518 = vmatpush.bf16.msra.mxu0 %v1201
    %1519 = vmatpush.bf16.msra.mxu0 %v1197
    %1520 = vmatpush.bf16.msra.mxu0 %v1193
    %1521 = vmatpush.bf16.msra.mxu0 %v1189
    %1522 = vmatpush.bf16.msra.mxu0 %v1185
    %1523 = vmatpush.bf16.msra.mxu0 %v1181
    %1524 = vmatpush.bf16.msra.mxu0 %v1177
    %1525 = vmatmul.bf16.gmra.mxu0 %v78
    %v1526 = vpop.f32.mrf.mxu0
    %v1527 = vadd.f32 %v1513, %v1526
    %v1528 = vpop.f32.mrf.mxu0
    %v1529 = vadd.f32 %v1515, %v1528
    %1530 = vdwg.mxu0
    %1531 = vmatpush.bf16.msra.mxu0 %v1014
    %1532 = vmatpush.bf16.msra.mxu0 %v1010
    %1533 = vmatpush.bf16.msra.mxu0 %v1006
    %1534 = vmatpush.bf16.msra.mxu0 %v1002
    %1535 = vmatpush.bf16.msra.mxu0 %v998
    %1536 = vmatpush.bf16.msra.mxu0 %v994
    %1537 = vmatpush.bf16.msra.mxu0 %v990
    %1538 = vmatpush.bf16.msra.mxu0 %v986
    %1539 = vmatmul.bf16.gmra.mxu0 %v72
    %v1540 = vpop.f32.mrf.mxu0
    %v1541 = vadd.f32 %v306, %v1540
    %v1542 = vpop.f32.mrf.mxu0
    %v1543 = vadd.f32 %v306, %v1542
    %1544 = vdwg.mxu0
    %1545 = vmatpush.bf16.msra.mxu0 %v1046
    %1546 = vmatpush.bf16.msra.mxu0 %v1042
    %1547 = vmatpush.bf16.msra.mxu0 %v1038
    %1548 = vmatpush.bf16.msra.mxu0 %v1034
    %1549 = vmatpush.bf16.msra.mxu0 %v1030
    %1550 = vmatpush.bf16.msra.mxu0 %v1026
    %1551 = vmatpush.bf16.msra.mxu0 %v1022
    %1552 = vmatpush.bf16.msra.mxu0 %v1018
    %1553 = vmatmul.bf16.gmra.mxu0 %v73
    %v1554 = vpop.f32.mrf.mxu0
    %v1555 = vadd.f32 %v1541, %v1554
    %v1556 = vpop.f32.mrf.mxu0
    %v1557 = vadd.f32 %v1543, %v1556
    %1558 = vdwg.mxu0
    %1559 = vmatpush.bf16.msra.mxu0 %v1078
    %1560 = vmatpush.bf16.msra.mxu0 %v1074
    %1561 = vmatpush.bf16.msra.mxu0 %v1070
    %1562 = vmatpush.bf16.msra.mxu0 %v1066
    %1563 = vmatpush.bf16.msra.mxu0 %v1062
    %1564 = vmatpush.bf16.msra.mxu0 %v1058
    %1565 = vmatpush.bf16.msra.mxu0 %v1054
    %1566 = vmatpush.bf16.msra.mxu0 %v1050
    %1567 = vmatmul.bf16.gmra.mxu0 %v74
    %v1568 = vpop.f32.mrf.mxu0
    %v1569 = vadd.f32 %v1555, %v1568
    %v1570 = vpop.f32.mrf.mxu0
    %v1571 = vadd.f32 %v1557, %v1570
    %1572 = vdwg.mxu0
    %1573 = vmatpush.bf16.msra.mxu0 %v1110
    %1574 = vmatpush.bf16.msra.mxu0 %v1106
    %1575 = vmatpush.bf16.msra.mxu0 %v1102
    %1576 = vmatpush.bf16.msra.mxu0 %v1098
    %1577 = vmatpush.bf16.msra.mxu0 %v1094
    %1578 = vmatpush.bf16.msra.mxu0 %v1090
    %1579 = vmatpush.bf16.msra.mxu0 %v1086
    %1580 = vmatpush.bf16.msra.mxu0 %v1082
    %1581 = vmatmul.bf16.gmra.mxu0 %v75
    %v1582 = vpop.f32.mrf.mxu0
    %v1583 = vadd.f32 %v1569, %v1582
    %v1584 = vpop.f32.mrf.mxu0
    %v1585 = vadd.f32 %v1571, %v1584
    %1586 = vdwg.mxu0
    %1587 = vmatpush.bf16.msra.mxu0 %v1142
    %1588 = vmatpush.bf16.msra.mxu0 %v1138
    %1589 = vmatpush.bf16.msra.mxu0 %v1134
    %1590 = vmatpush.bf16.msra.mxu0 %v1130
    %1591 = vmatpush.bf16.msra.mxu0 %v1126
    %1592 = vmatpush.bf16.msra.mxu0 %v1122
    %1593 = vmatpush.bf16.msra.mxu0 %v1118
    %1594 = vmatpush.bf16.msra.mxu0 %v1114
    %1595 = vmatmul.bf16.gmra.mxu0 %v76
    %v1596 = vpop.f32.mrf.mxu0
    %v1597 = vadd.f32 %v1583, %v1596
    %v1598 = vpop.f32.mrf.mxu0
    %v1599 = vadd.f32 %v1585, %v1598
    %1600 = vdwg.mxu0
    %1601 = vmatpush.bf16.msra.mxu0 %v1174
    %1602 = vmatpush.bf16.msra.mxu0 %v1170
    %1603 = vmatpush.bf16.msra.mxu0 %v1166
    %1604 = vmatpush.bf16.msra.mxu0 %v1162
    %1605 = vmatpush.bf16.msra.mxu0 %v1158
    %1606 = vmatpush.bf16.msra.mxu0 %v1154
    %1607 = vmatpush.bf16.msra.mxu0 %v1150
    %1608 = vmatpush.bf16.msra.mxu0 %v1146
    %1609 = vmatmul.bf16.gmra.mxu0 %v77
    %v1610 = vpop.f32.mrf.mxu0
    %v1611 = vadd.f32 %v1597, %v1610
    %v1612 = vpop.f32.mrf.mxu0
    %v1613 = vadd.f32 %v1599, %v1612
    %1614 = vdwg.mxu0
    %1615 = vmatpush.bf16.msra.mxu0 %v1206
    %1616 = vmatpush.bf16.msra.mxu0 %v1202
    %1617 = vmatpush.bf16.msra.mxu0 %v1198
    %1618 = vmatpush.bf16.msra.mxu0 %v1194
    %1619 = vmatpush.bf16.msra.mxu0 %v1190
    %1620 = vmatpush.bf16.msra.mxu0 %v1186
    %1621 = vmatpush.bf16.msra.mxu0 %v1182
    %1622 = vmatpush.bf16.msra.mxu0 %v1178
    %1623 = vmatmul.bf16.gmra.mxu0 %v78
    %v1624 = vpop.f32.mrf.mxu0
    %v1625 = vadd.f32 %v1611, %v1624
    %v1626 = vpop.f32.mrf.mxu0
    %v1627 = vadd.f32 %v1613, %v1626
    %1628 = vdwg.mxu0
    %1629 = vmatpush.bf16.msra.mxu0 %v1015
    %1630 = vmatpush.bf16.msra.mxu0 %v1011
    %1631 = vmatpush.bf16.msra.mxu0 %v1007
    %1632 = vmatpush.bf16.msra.mxu0 %v1003
    %1633 = vmatpush.bf16.msra.mxu0 %v999
    %1634 = vmatpush.bf16.msra.mxu0 %v995
    %1635 = vmatpush.bf16.msra.mxu0 %v991
    %1636 = vmatpush.bf16.msra.mxu0 %v987
    %1637 = vmatmul.bf16.gmra.mxu0 %v72
    %v1638 = vpop.f32.mrf.mxu0
    %v1639 = vadd.f32 %v307, %v1638
    %v1640 = vpop.f32.mrf.mxu0
    %v1641 = vadd.f32 %v307, %v1640
    %1642 = vdwg.mxu0
    %1643 = vmatpush.bf16.msra.mxu0 %v1047
    %1644 = vmatpush.bf16.msra.mxu0 %v1043
    %1645 = vmatpush.bf16.msra.mxu0 %v1039
    %1646 = vmatpush.bf16.msra.mxu0 %v1035
    %1647 = vmatpush.bf16.msra.mxu0 %v1031
    %1648 = vmatpush.bf16.msra.mxu0 %v1027
    %1649 = vmatpush.bf16.msra.mxu0 %v1023
    %1650 = vmatpush.bf16.msra.mxu0 %v1019
    %1651 = vmatmul.bf16.gmra.mxu0 %v73
    %v1652 = vpop.f32.mrf.mxu0
    %v1653 = vadd.f32 %v1639, %v1652
    %v1654 = vpop.f32.mrf.mxu0
    %v1655 = vadd.f32 %v1641, %v1654
    %1656 = vdwg.mxu0
    %1657 = vmatpush.bf16.msra.mxu0 %v1079
    %1658 = vmatpush.bf16.msra.mxu0 %v1075
    %1659 = vmatpush.bf16.msra.mxu0 %v1071
    %1660 = vmatpush.bf16.msra.mxu0 %v1067
    %1661 = vmatpush.bf16.msra.mxu0 %v1063
    %1662 = vmatpush.bf16.msra.mxu0 %v1059
    %1663 = vmatpush.bf16.msra.mxu0 %v1055
    %1664 = vmatpush.bf16.msra.mxu0 %v1051
    %1665 = vmatmul.bf16.gmra.mxu0 %v74
    %v1666 = vpop.f32.mrf.mxu0
    %v1667 = vadd.f32 %v1653, %v1666
    %v1668 = vpop.f32.mrf.mxu0
    %v1669 = vadd.f32 %v1655, %v1668
    %1670 = vdwg.mxu0
    %1671 = vmatpush.bf16.msra.mxu0 %v1111
    %1672 = vmatpush.bf16.msra.mxu0 %v1107
    %1673 = vmatpush.bf16.msra.mxu0 %v1103
    %1674 = vmatpush.bf16.msra.mxu0 %v1099
    %1675 = vmatpush.bf16.msra.mxu0 %v1095
    %1676 = vmatpush.bf16.msra.mxu0 %v1091
    %1677 = vmatpush.bf16.msra.mxu0 %v1087
    %1678 = vmatpush.bf16.msra.mxu0 %v1083
    %1679 = vmatmul.bf16.gmra.mxu0 %v75
    %v1680 = vpop.f32.mrf.mxu0
    %v1681 = vadd.f32 %v1667, %v1680
    %v1682 = vpop.f32.mrf.mxu0
    %v1683 = vadd.f32 %v1669, %v1682
    %1684 = vdwg.mxu0
    %1685 = vmatpush.bf16.msra.mxu0 %v1143
    %1686 = vmatpush.bf16.msra.mxu0 %v1139
    %1687 = vmatpush.bf16.msra.mxu0 %v1135
    %1688 = vmatpush.bf16.msra.mxu0 %v1131
    %1689 = vmatpush.bf16.msra.mxu0 %v1127
    %1690 = vmatpush.bf16.msra.mxu0 %v1123
    %1691 = vmatpush.bf16.msra.mxu0 %v1119
    %1692 = vmatpush.bf16.msra.mxu0 %v1115
    %1693 = vmatmul.bf16.gmra.mxu0 %v76
    %v1694 = vpop.f32.mrf.mxu0
    %v1695 = vadd.f32 %v1681, %v1694
    %v1696 = vpop.f32.mrf.mxu0
    %v1697 = vadd.f32 %v1683, %v1696
    %1698 = vdwg.mxu0
    %1699 = vmatpush.bf16.msra.mxu0 %v1175
    %1700 = vmatpush.bf16.msra.mxu0 %v1171
    %1701 = vmatpush.bf16.msra.mxu0 %v1167
    %1702 = vmatpush.bf16.msra.mxu0 %v1163
    %1703 = vmatpush.bf16.msra.mxu0 %v1159
    %1704 = vmatpush.bf16.msra.mxu0 %v1155
    %1705 = vmatpush.bf16.msra.mxu0 %v1151
    %1706 = vmatpush.bf16.msra.mxu0 %v1147
    %1707 = vmatmul.bf16.gmra.mxu0 %v77
    %v1708 = vpop.f32.mrf.mxu0
    %v1709 = vadd.f32 %v1695, %v1708
    %v1710 = vpop.f32.mrf.mxu0
    %v1711 = vadd.f32 %v1697, %v1710
    %1712 = vdwg.mxu0
    %1713 = vmatpush.bf16.msra.mxu0 %v1207
    %1714 = vmatpush.bf16.msra.mxu0 %v1203
    %1715 = vmatpush.bf16.msra.mxu0 %v1199
    %1716 = vmatpush.bf16.msra.mxu0 %v1195
    %1717 = vmatpush.bf16.msra.mxu0 %v1191
    %1718 = vmatpush.bf16.msra.mxu0 %v1187
    %1719 = vmatpush.bf16.msra.mxu0 %v1183
    %1720 = vmatpush.bf16.msra.mxu0 %v1179
    %1721 = vmatmul.bf16.gmra.mxu0 %v78
    %v1722 = vpop.f32.mrf.mxu0
    %v1723 = vadd.f32 %v1709, %v1722
    %v1724 = vpop.f32.mrf.mxu0
    %v1725 = vadd.f32 %v1711, %v1724
    %1726 = vdwg.mxu0
    %1727 = vmatpush.bf16.msra.mxu0 %v1016
    %1728 = vmatpush.bf16.msra.mxu0 %v1012
    %1729 = vmatpush.bf16.msra.mxu0 %v1008
    %1730 = vmatpush.bf16.msra.mxu0 %v1004
    %1731 = vmatpush.bf16.msra.mxu0 %v1000
    %1732 = vmatpush.bf16.msra.mxu0 %v996
    %1733 = vmatpush.bf16.msra.mxu0 %v992
    %1734 = vmatpush.bf16.msra.mxu0 %v988
    %1735 = vmatmul.bf16.gmra.mxu0 %v72
    %v1736 = vpop.f32.mrf.mxu0
    %v1737 = vadd.f32 %v308, %v1736
    %v1738 = vpop.f32.mrf.mxu0
    %v1739 = vadd.f32 %v308, %v1738
    %1740 = vdwg.mxu0
    %1741 = vmatpush.bf16.msra.mxu0 %v1048
    %1742 = vmatpush.bf16.msra.mxu0 %v1044
    %1743 = vmatpush.bf16.msra.mxu0 %v1040
    %1744 = vmatpush.bf16.msra.mxu0 %v1036
    %1745 = vmatpush.bf16.msra.mxu0 %v1032
    %1746 = vmatpush.bf16.msra.mxu0 %v1028
    %1747 = vmatpush.bf16.msra.mxu0 %v1024
    %1748 = vmatpush.bf16.msra.mxu0 %v1020
    %1749 = vmatmul.bf16.gmra.mxu0 %v73
    %v1750 = vpop.f32.mrf.mxu0
    %v1751 = vadd.f32 %v1737, %v1750
    %v1752 = vpop.f32.mrf.mxu0
    %v1753 = vadd.f32 %v1739, %v1752
    %1754 = vdwg.mxu0
    %1755 = vmatpush.bf16.msra.mxu0 %v1080
    %1756 = vmatpush.bf16.msra.mxu0 %v1076
    %1757 = vmatpush.bf16.msra.mxu0 %v1072
    %1758 = vmatpush.bf16.msra.mxu0 %v1068
    %1759 = vmatpush.bf16.msra.mxu0 %v1064
    %1760 = vmatpush.bf16.msra.mxu0 %v1060
    %1761 = vmatpush.bf16.msra.mxu0 %v1056
    %1762 = vmatpush.bf16.msra.mxu0 %v1052
    %1763 = vmatmul.bf16.gmra.mxu0 %v74
    %v1764 = vpop.f32.mrf.mxu0
    %v1765 = vadd.f32 %v1751, %v1764
    %v1766 = vpop.f32.mrf.mxu0
    %v1767 = vadd.f32 %v1753, %v1766
    %1768 = vdwg.mxu0
    %1769 = vmatpush.bf16.msra.mxu0 %v1112
    %1770 = vmatpush.bf16.msra.mxu0 %v1108
    %1771 = vmatpush.bf16.msra.mxu0 %v1104
    %1772 = vmatpush.bf16.msra.mxu0 %v1100
    %1773 = vmatpush.bf16.msra.mxu0 %v1096
    %1774 = vmatpush.bf16.msra.mxu0 %v1092
    %1775 = vmatpush.bf16.msra.mxu0 %v1088
    %1776 = vmatpush.bf16.msra.mxu0 %v1084
    %1777 = vmatmul.bf16.gmra.mxu0 %v75
    %v1778 = vpop.f32.mrf.mxu0
    %v1779 = vadd.f32 %v1765, %v1778
    %v1780 = vpop.f32.mrf.mxu0
    %v1781 = vadd.f32 %v1767, %v1780
    %1782 = vdwg.mxu0
    %1783 = vmatpush.bf16.msra.mxu0 %v1144
    %1784 = vmatpush.bf16.msra.mxu0 %v1140
    %1785 = vmatpush.bf16.msra.mxu0 %v1136
    %1786 = vmatpush.bf16.msra.mxu0 %v1132
    %1787 = vmatpush.bf16.msra.mxu0 %v1128
    %1788 = vmatpush.bf16.msra.mxu0 %v1124
    %1789 = vmatpush.bf16.msra.mxu0 %v1120
    %1790 = vmatpush.bf16.msra.mxu0 %v1116
    %1791 = vmatmul.bf16.gmra.mxu0 %v76
    %v1792 = vpop.f32.mrf.mxu0
    %v1793 = vadd.f32 %v1779, %v1792
    %v1794 = vpop.f32.mrf.mxu0
    %v1795 = vadd.f32 %v1781, %v1794
    %1796 = vdwg.mxu0
    %1797 = vmatpush.bf16.msra.mxu0 %v1176
    %1798 = vmatpush.bf16.msra.mxu0 %v1172
    %1799 = vmatpush.bf16.msra.mxu0 %v1168
    %1800 = vmatpush.bf16.msra.mxu0 %v1164
    %1801 = vmatpush.bf16.msra.mxu0 %v1160
    %1802 = vmatpush.bf16.msra.mxu0 %v1156
    %1803 = vmatpush.bf16.msra.mxu0 %v1152
    %1804 = vmatpush.bf16.msra.mxu0 %v1148
    %1805 = vmatmul.bf16.gmra.mxu0 %v77
    %v1806 = vpop.f32.mrf.mxu0
    %v1807 = vadd.f32 %v1793, %v1806
    %v1808 = vpop.f32.mrf.mxu0
    %v1809 = vadd.f32 %v1795, %v1808
    %1810 = vdwg.mxu0
    %1811 = vmatpush.bf16.msra.mxu0 %v1208
    %1812 = vmatpush.bf16.msra.mxu0 %v1204
    %1813 = vmatpush.bf16.msra.mxu0 %v1200
    %1814 = vmatpush.bf16.msra.mxu0 %v1196
    %1815 = vmatpush.bf16.msra.mxu0 %v1192
    %1816 = vmatpush.bf16.msra.mxu0 %v1188
    %1817 = vmatpush.bf16.msra.mxu0 %v1184
    %1818 = vmatpush.bf16.msra.mxu0 %v1180
    %1819 = vmatmul.bf16.gmra.mxu0 %v78
    %v1820 = vpop.f32.mrf.mxu0
    %v1821 = vadd.f32 %v1807, %v1820
    %v1822 = vpop.f32.mrf.mxu0
    %v1823 = vadd.f32 %v1809, %v1822
    %1824 = vdwg.mxu0
    %v1825 = vmax.f32 %v1527, 0.0
    %v1826 = vmax.f32 %v1625, 0.0
    %v1827 = vmax.f32 %v1723, 0.0
    %v1828 = vmax.f32 %v1821, 0.0
    %v1829 = vmax.f32 %v1529, 0.0
    %v1830 = vmax.f32 %v1627, 0.0
    %v1831 = vmax.f32 %v1725, 0.0
    %v1832 = vmax.f32 %v1823, 0.0
    %v1833 = vpack.c.bf16 %v1829, %v1825
    %v1834 = vpack.c.bf16 %v1830, %v1826
    %v1835 = vpack.c.bf16 %v1831, %v1827
    %v1836 = vpack.c.bf16 %v1832, %v1828
    %v1837 = vld [vmem:[#allocation4] sm:$0xff]
    %v1838 = vld [vmem:[#allocation4 + $0x8] sm:$0xff]
    %v1839 = vld [vmem:[#allocation4 + $0x10] sm:$0xff]
    %v1840 = vld [vmem:[#allocation4 + $0x18] sm:$0xff]
    %v1841 = vld [vmem:[#allocation4 + $0x20] sm:$0xff]
    %v1842 = vld [vmem:[#allocation4 + $0x28] sm:$0xff]
    %v1843 = vld [vmem:[#allocation4 + $0x30] sm:$0xff]
    %v1844 = vld [vmem:[#allocation4 + $0x38] sm:$0xff]
    %v1845 = vld [vmem:[#allocation4 + $0x40] sm:$0xff]
    %v1846 = vld [vmem:[#allocation4 + $0x48] sm:$0xff]
    %v1847 = vld [vmem:[#allocation4 + $0x50] sm:$0xff]
    %v1848 = vld [vmem:[#allocation4 + $0x58] sm:$0xff]
    %v1849 = vld [vmem:[#allocation4 + $0x60] sm:$0xff]
    %v1850 = vld [vmem:[#allocation4 + $0x68] sm:$0xff]
    %v1851 = vld [vmem:[#allocation4 + $0x70] sm:$0xff]
    %v1852 = vld [vmem:[#allocation4 + $0x78] sm:$0xff]
    %v1853 = vld [vmem:[#allocation4 + $0x80] sm:$0xff]
    %v1854 = vld [vmem:[#allocation4 + $0x88] sm:$0xff]
    %v1855 = vld [vmem:[#allocation4 + $0x90] sm:$0xff]
    %v1856 = vld [vmem:[#allocation4 + $0x98] sm:$0xff]
    %v1857 = vld [vmem:[#allocation4 + $0xa0] sm:$0xff]
    %v1858 = vld [vmem:[#allocation4 + $0xa8] sm:$0xff]
    %v1859 = vld [vmem:[#allocation4 + $0xb0] sm:$0xff]
    %v1860 = vld [vmem:[#allocation4 + $0xb8] sm:$0xff]
    %v1861 = vld [vmem:[#allocation4 + $0xc0] sm:$0xff]
    %v1862 = vld [vmem:[#allocation4 + $0xc8] sm:$0xff]
    %v1863 = vld [vmem:[#allocation4 + $0xd0] sm:$0xff]
    %v1864 = vld [vmem:[#allocation4 + $0xd8] sm:$0xff]
    %v1865 = vld [vmem:[#allocation4 + $0xe0] sm:$0xff]
    %v1866 = vld [vmem:[#allocation4 + $0xe8] sm:$0xff]
    %v1867 = vld [vmem:[#allocation4 + $0xf0] sm:$0xff]
    %v1868 = vld [vmem:[#allocation4 + $0xf8] sm:$0xff]
    %v1869 = vld [vmem:[#allocation4 + $0x100] sm:$0xff]
    %v1870 = vld [vmem:[#allocation4 + $0x108] sm:$0xff]
    %v1871 = vld [vmem:[#allocation4 + $0x110] sm:$0xff]
    %v1872 = vld [vmem:[#allocation4 + $0x118] sm:$0xff]
    %v1873 = vld [vmem:[#allocation4 + $0x120] sm:$0xff]
    %v1874 = vld [vmem:[#allocation4 + $0x128] sm:$0xff]
    %v1875 = vld [vmem:[#allocation4 + $0x130] sm:$0xff]
    %v1876 = vld [vmem:[#allocation4 + $0x138] sm:$0xff]
    %v1877 = vld [vmem:[#allocation4 + $0x140] sm:$0xff]
    %v1878 = vld [vmem:[#allocation4 + $0x148] sm:$0xff]
    %v1879 = vld [vmem:[#allocation4 + $0x150] sm:$0xff]
    %v1880 = vld [vmem:[#allocation4 + $0x158] sm:$0xff]
    %v1881 = vld [vmem:[#allocation4 + $0x160] sm:$0xff]
    %v1882 = vld [vmem:[#allocation4 + $0x168] sm:$0xff]
    %v1883 = vld [vmem:[#allocation4 + $0x170] sm:$0xff]
    %v1884 = vld [vmem:[#allocation4 + $0x178] sm:$0xff]
    %v1885 = vld [vmem:[#allocation4 + $0x180] sm:$0xff]
    %v1886 = vld [vmem:[#allocation4 + $0x188] sm:$0xff]
    %v1887 = vld [vmem:[#allocation4 + $0x190] sm:$0xff]
    %v1888 = vld [vmem:[#allocation4 + $0x198] sm:$0xff]
    %v1889 = vld [vmem:[#allocation4 + $0x1a0] sm:$0xff]
    %v1890 = vld [vmem:[#allocation4 + $0x1a8] sm:$0xff]
    %v1891 = vld [vmem:[#allocation4 + $0x1b0] sm:$0xff]
    %v1892 = vld [vmem:[#allocation4 + $0x1b8] sm:$0xff]
    %v1893 = vld [vmem:[#allocation4 + $0x1c0] sm:$0xff]
    %v1894 = vld [vmem:[#allocation4 + $0x1c8] sm:$0xff]
    %v1895 = vld [vmem:[#allocation4 + $0x1d0] sm:$0xff]
    %v1896 = vld [vmem:[#allocation4 + $0x1d8] sm:$0xff]
    %v1897 = vld [vmem:[#allocation4 + $0x1e0] sm:$0xff]
    %v1898 = vld [vmem:[#allocation4 + $0x1e8] sm:$0xff]
    %v1899 = vld [vmem:[#allocation4 + $0x1f0] sm:$0xff]
    %v1900 = vld [vmem:[#allocation4 + $0x1f8] sm:$0xff]
    %v1901 = vld [vmem:[%s4] sm:$0x3]
    %v1903 = vperm.slane %v1901, 0
    %v1904 = vperm.slane %v1901, 1
    %v1971 = vunpack.c.l.b16 %v1837
    %v1972 = vunpack.c.h.b16 %v1837
    %v1973 = vunpack.c.l.b16 %v1838
    %v1974 = vunpack.c.h.b16 %v1838
    %v1975 = vunpack.c.l.b16 %v1839
    %v1976 = vunpack.c.h.b16 %v1839
    %v1977 = vunpack.c.l.b16 %v1840
    %v1978 = vunpack.c.h.b16 %v1840
    %v1979 = vunpack.c.l.b16 %v1841
    %v1980 = vunpack.c.h.b16 %v1841
    %v1981 = vunpack.c.l.b16 %v1842
    %v1982 = vunpack.c.h.b16 %v1842
    %v1983 = vunpack.c.l.b16 %v1843
    %v1984 = vunpack.c.h.b16 %v1843
    %v1985 = vunpack.c.l.b16 %v1844
    %v1986 = vunpack.c.h.b16 %v1844
    %v1987 = vunpack.c.l.b16 %v1845
    %v1988 = vunpack.c.h.b16 %v1845
    %v1989 = vunpack.c.l.b16 %v1846
    %v1990 = vunpack.c.h.b16 %v1846
    %v1991 = vunpack.c.l.b16 %v1847
    %v1992 = vunpack.c.h.b16 %v1847
    %v1993 = vunpack.c.l.b16 %v1848
    %v1994 = vunpack.c.h.b16 %v1848
    %v1995 = vunpack.c.l.b16 %v1849
    %v1996 = vunpack.c.h.b16 %v1849
    %v1997 = vunpack.c.l.b16 %v1850
    %v1998 = vunpack.c.h.b16 %v1850
    %v1999 = vunpack.c.l.b16 %v1851
    %v2000 = vunpack.c.h.b16 %v1851
    %v2001 = vunpack.c.l.b16 %v1852
    %v2002 = vunpack.c.h.b16 %v1852
    %v2003 = vunpack.c.l.b16 %v1853
    %v2004 = vunpack.c.h.b16 %v1853
    %v2005 = vunpack.c.l.b16 %v1854
    %v2006 = vunpack.c.h.b16 %v1854
    %v2007 = vunpack.c.l.b16 %v1855
    %v2008 = vunpack.c.h.b16 %v1855
    %v2009 = vunpack.c.l.b16 %v1856
    %v2010 = vunpack.c.h.b16 %v1856
    %v2011 = vunpack.c.l.b16 %v1857
    %v2012 = vunpack.c.h.b16 %v1857
    %v2013 = vunpack.c.l.b16 %v1858
    %v2014 = vunpack.c.h.b16 %v1858
    %v2015 = vunpack.c.l.b16 %v1859
    %v2016 = vunpack.c.h.b16 %v1859
    %v2017 = vunpack.c.l.b16 %v1860
    %v2018 = vunpack.c.h.b16 %v1860
    %v2019 = vunpack.c.l.b16 %v1861
    %v2020 = vunpack.c.h.b16 %v1861
    %v2021 = vunpack.c.l.b16 %v1862
    %v2022 = vunpack.c.h.b16 %v1862
    %v2023 = vunpack.c.l.b16 %v1863
    %v2024 = vunpack.c.h.b16 %v1863
    %v2025 = vunpack.c.l.b16 %v1864
    %v2026 = vunpack.c.h.b16 %v1864
    %v2027 = vunpack.c.l.b16 %v1865
    %v2028 = vunpack.c.h.b16 %v1865
    %v2029 = vunpack.c.l.b16 %v1866
    %v2030 = vunpack.c.h.b16 %v1866
    %v2031 = vunpack.c.l.b16 %v1867
    %v2032 = vunpack.c.h.b16 %v1867
    %v2033 = vunpack.c.l.b16 %v1868
    %v2034 = vunpack.c.h.b16 %v1868
    %v2035 = vunpack.c.l.b16 %v1869
    %v2036 = vunpack.c.h.b16 %v1869
    %v2037 = vunpack.c.l.b16 %v1870
    %v2038 = vunpack.c.h.b16 %v1870
    %v2039 = vunpack.c.l.b16 %v1871
    %v2040 = vunpack.c.h.b16 %v1871
    %v2041 = vunpack.c.l.b16 %v1872
    %v2042 = vunpack.c.h.b16 %v1872
    %v2043 = vunpack.c.l.b16 %v1873
    %v2044 = vunpack.c.h.b16 %v1873
    %v2045 = vunpack.c.l.b16 %v1874
    %v2046 = vunpack.c.h.b16 %v1874
    %v2047 = vunpack.c.l.b16 %v1875
    %v2048 = vunpack.c.h.b16 %v1875
    %v2049 = vunpack.c.l.b16 %v1876
    %v2050 = vunpack.c.h.b16 %v1876
    %v2051 = vunpack.c.l.b16 %v1877
    %v2052 = vunpack.c.h.b16 %v1877
    %v2053 = vunpack.c.l.b16 %v1878
    %v2054 = vunpack.c.h.b16 %v1878
    %v2055 = vunpack.c.l.b16 %v1879
    %v2056 = vunpack.c.h.b16 %v1879
    %v2057 = vunpack.c.l.b16 %v1880
    %v2058 = vunpack.c.h.b16 %v1880
    %v2059 = vunpack.c.l.b16 %v1881
    %v2060 = vunpack.c.h.b16 %v1881
    %v2061 = vunpack.c.l.b16 %v1882
    %v2062 = vunpack.c.h.b16 %v1882
    %v2063 = vunpack.c.l.b16 %v1883
    %v2064 = vunpack.c.h.b16 %v1883
    %v2065 = vunpack.c.l.b16 %v1884
    %v2066 = vunpack.c.h.b16 %v1884
    %v2067 = vunpack.c.l.b16 %v1885
    %v2068 = vunpack.c.h.b16 %v1885
    %v2069 = vunpack.c.l.b16 %v1886
    %v2070 = vunpack.c.h.b16 %v1886
    %v2071 = vunpack.c.l.b16 %v1887
    %v2072 = vunpack.c.h.b16 %v1887
    %v2073 = vunpack.c.l.b16 %v1888
    %v2074 = vunpack.c.h.b16 %v1888
    %v2075 = vunpack.c.l.b16 %v1889
    %v2076 = vunpack.c.h.b16 %v1889
    %v2077 = vunpack.c.l.b16 %v1890
    %v2078 = vunpack.c.h.b16 %v1890
    %v2079 = vunpack.c.l.b16 %v1891
    %v2080 = vunpack.c.h.b16 %v1891
    %v2081 = vunpack.c.l.b16 %v1892
    %v2082 = vunpack.c.h.b16 %v1892
    %v2083 = vunpack.c.l.b16 %v1893
    %v2084 = vunpack.c.h.b16 %v1893
    %v2085 = vunpack.c.l.b16 %v1894
    %v2086 = vunpack.c.h.b16 %v1894
    %v2087 = vunpack.c.l.b16 %v1895
    %v2088 = vunpack.c.h.b16 %v1895
    %v2089 = vunpack.c.l.b16 %v1896
    %v2090 = vunpack.c.h.b16 %v1896
    %v2091 = vunpack.c.l.b16 %v1897
    %v2092 = vunpack.c.h.b16 %v1897
    %v2093 = vunpack.c.l.b16 %v1898
    %v2094 = vunpack.c.h.b16 %v1898
    %v2095 = vunpack.c.l.b16 %v1899
    %v2096 = vunpack.c.h.b16 %v1899
    %v2097 = vunpack.c.l.b16 %v1900
    %v2098 = vunpack.c.h.b16 %v1900
    %v2099 = vpack.c.b16 %v1973, %v1971
    %v2100 = vpack.c.b16 %v1974, %v1972
    %v2101 = vpack.c.b16 %v1977, %v1975
    %v2102 = vpack.c.b16 %v1978, %v1976
    %v2103 = vpack.c.b16 %v1981, %v1979
    %v2104 = vpack.c.b16 %v1982, %v1980
    %v2105 = vpack.c.b16 %v1985, %v1983
    %v2106 = vpack.c.b16 %v1986, %v1984
    %v2107 = vpack.c.b16 %v1989, %v1987
    %v2108 = vpack.c.b16 %v1990, %v1988
    %v2109 = vpack.c.b16 %v1993, %v1991
    %v2110 = vpack.c.b16 %v1994, %v1992
    %v2111 = vpack.c.b16 %v1997, %v1995
    %v2112 = vpack.c.b16 %v1998, %v1996
    %v2113 = vpack.c.b16 %v2001, %v1999
    %v2114 = vpack.c.b16 %v2002, %v2000
    %v2115 = vpack.c.b16 %v2005, %v2003
    %v2116 = vpack.c.b16 %v2006, %v2004
    %v2117 = vpack.c.b16 %v2009, %v2007
    %v2118 = vpack.c.b16 %v2010, %v2008
    %v2119 = vpack.c.b16 %v2013, %v2011
    %v2120 = vpack.c.b16 %v2014, %v2012
    %v2121 = vpack.c.b16 %v2017, %v2015
    %v2122 = vpack.c.b16 %v2018, %v2016
    %v2123 = vpack.c.b16 %v2021, %v2019
    %v2124 = vpack.c.b16 %v2022, %v2020
    %v2125 = vpack.c.b16 %v2025, %v2023
    %v2126 = vpack.c.b16 %v2026, %v2024
    %v2127 = vpack.c.b16 %v2029, %v2027
    %v2128 = vpack.c.b16 %v2030, %v2028
    %v2129 = vpack.c.b16 %v2033, %v2031
    %v2130 = vpack.c.b16 %v2034, %v2032
    %v2131 = vpack.c.b16 %v2037, %v2035
    %v2132 = vpack.c.b16 %v2038, %v2036
    %v2133 = vpack.c.b16 %v2041, %v2039
    %v2134 = vpack.c.b16 %v2042, %v2040
    %v2135 = vpack.c.b16 %v2045, %v2043
    %v2136 = vpack.c.b16 %v2046, %v2044
    %v2137 = vpack.c.b16 %v2049, %v2047
    %v2138 = vpack.c.b16 %v2050, %v2048
    %v2139 = vpack.c.b16 %v2053, %v2051
    %v2140 = vpack.c.b16 %v2054, %v2052
    %v2141 = vpack.c.b16 %v2057, %v2055
    %v2142 = vpack.c.b16 %v2058, %v2056
    %v2143 = vpack.c.b16 %v2061, %v2059
    %v2144 = vpack.c.b16 %v2062, %v2060
    %v2145 = vpack.c.b16 %v2065, %v2063
    %v2146 = vpack.c.b16 %v2066, %v2064
    %v2147 = vpack.c.b16 %v2069, %v2067
    %v2148 = vpack.c.b16 %v2070, %v2068
    %v2149 = vpack.c.b16 %v2073, %v2071
    %v2150 = vpack.c.b16 %v2074, %v2072
    %v2151 = vpack.c.b16 %v2077, %v2075
    %v2152 = vpack.c.b16 %v2078, %v2076
    %v2153 = vpack.c.b16 %v2081, %v2079
    %v2154 = vpack.c.b16 %v2082, %v2080
    %v2155 = vpack.c.b16 %v2085, %v2083
    %v2156 = vpack.c.b16 %v2086, %v2084
    %v2157 = vpack.c.b16 %v2089, %v2087
    %v2158 = vpack.c.b16 %v2090, %v2088
    %v2159 = vpack.c.b16 %v2093, %v2091
    %v2160 = vpack.c.b16 %v2094, %v2092
    %v2161 = vpack.c.b16 %v2097, %v2095
    %v2162 = vpack.c.b16 %v2098, %v2096
    %2227 = vmatpush.bf16.msra.mxu0 %v2113
    %2228 = vmatpush.bf16.msra.mxu0 %v2111
    %2229 = vmatpush.bf16.msra.mxu0 %v2109
    %2230 = vmatpush.bf16.msra.mxu0 %v2107
    %2231 = vmatpush.bf16.msra.mxu0 %v2105
    %2232 = vmatpush.bf16.msra.mxu0 %v2103
    %2233 = vmatpush.bf16.msra.mxu0 %v2101
    %2234 = vmatpush.bf16.msra.mxu0 %v2099
    %2235 = vmatmul.bf16.gmra.mxu0 %v1833
    %v2236 = vpop.f32.mrf.mxu0
    %v2237 = vadd.f32 %v1903, %v2236
    %v2238 = vpop.f32.mrf.mxu0
    %v2239 = vadd.f32 %v1903, %v2238
    %2240 = vdwg.mxu0
    %2241 = vmatpush.bf16.msra.mxu0 %v2129
    %2242 = vmatpush.bf16.msra.mxu0 %v2127
    %2243 = vmatpush.bf16.msra.mxu0 %v2125
    %2244 = vmatpush.bf16.msra.mxu0 %v2123
    %2245 = vmatpush.bf16.msra.mxu0 %v2121
    %2246 = vmatpush.bf16.msra.mxu0 %v2119
    %2247 = vmatpush.bf16.msra.mxu0 %v2117
    %2248 = vmatpush.bf16.msra.mxu0 %v2115
    %2249 = vmatmul.bf16.gmra.mxu0 %v1834
    %v2250 = vpop.f32.mrf.mxu0
    %v2251 = vadd.f32 %v2237, %v2250
    %v2252 = vpop.f32.mrf.mxu0
    %v2253 = vadd.f32 %v2239, %v2252
    %2254 = vdwg.mxu0
    %2255 = vmatpush.bf16.msra.mxu0 %v2145
    %2256 = vmatpush.bf16.msra.mxu0 %v2143
    %2257 = vmatpush.bf16.msra.mxu0 %v2141
    %2258 = vmatpush.bf16.msra.mxu0 %v2139
    %2259 = vmatpush.bf16.msra.mxu0 %v2137
    %2260 = vmatpush.bf16.msra.mxu0 %v2135
    %2261 = vmatpush.bf16.msra.mxu0 %v2133
    %2262 = vmatpush.bf16.msra.mxu0 %v2131
    %2263 = vmatmul.bf16.gmra.mxu0 %v1835
    %v2264 = vpop.f32.mrf.mxu0
    %v2265 = vadd.f32 %v2251, %v2264
    %v2266 = vpop.f32.mrf.mxu0
    %v2267 = vadd.f32 %v2253, %v2266
    %2268 = vdwg.mxu0
    %2269 = vmatpush.bf16.msra.mxu0 %v2161
    %2270 = vmatpush.bf16.msra.mxu0 %v2159
    %2271 = vmatpush.bf16.msra.mxu0 %v2157
    %2272 = vmatpush.bf16.msra.mxu0 %v2155
    %2273 = vmatpush.bf16.msra.mxu0 %v2153
    %2274 = vmatpush.bf16.msra.mxu0 %v2151
    %2275 = vmatpush.bf16.msra.mxu0 %v2149
    %2276 = vmatpush.bf16.msra.mxu0 %v2147
    %2277 = vmatmul.bf16.gmra.mxu0 %v1836
    %v2278 = vpop.f32.mrf.mxu0
    %v2279 = vadd.f32 %v2265, %v2278
    %v2280 = vpop.f32.mrf.mxu0
    %v2281 = vadd.f32 %v2267, %v2280
    %2282 = vdwg.mxu0
    %2283 = vmatpush.bf16.msra.mxu0 %v2114
    %2284 = vmatpush.bf16.msra.mxu0 %v2112
    %2285 = vmatpush.bf16.msra.mxu0 %v2110
    %2286 = vmatpush.bf16.msra.mxu0 %v2108
    %2287 = vmatpush.bf16.msra.mxu0 %v2106
    %2288 = vmatpush.bf16.msra.mxu0 %v2104
    %2289 = vmatpush.bf16.msra.mxu0 %v2102
    %2290 = vmatpush.bf16.msra.mxu0 %v2100
    %2291 = vmatmul.bf16.gmra.mxu0 %v1833
    %v2292 = vpop.f32.mrf.mxu0
    %v2293 = vadd.f32 %v1904, %v2292
    %v2294 = vpop.f32.mrf.mxu0
    %v2295 = vadd.f32 %v1904, %v2294
    %2296 = vdwg.mxu0
    %2297 = vmatpush.bf16.msra.mxu0 %v2130
    %2298 = vmatpush.bf16.msra.mxu0 %v2128
    %2299 = vmatpush.bf16.msra.mxu0 %v2126
    %2300 = vmatpush.bf16.msra.mxu0 %v2124
    %2301 = vmatpush.bf16.msra.mxu0 %v2122
    %2302 = vmatpush.bf16.msra.mxu0 %v2120
    %2303 = vmatpush.bf16.msra.mxu0 %v2118
    %2304 = vmatpush.bf16.msra.mxu0 %v2116
    %2305 = vmatmul.bf16.gmra.mxu0 %v1834
    %v2306 = vpop.f32.mrf.mxu0
    %v2307 = vadd.f32 %v2293, %v2306
    %v2308 = vpop.f32.mrf.mxu0
    %v2309 = vadd.f32 %v2295, %v2308
    %2310 = vdwg.mxu0
    %2311 = vmatpush.bf16.msra.mxu0 %v2146
    %2312 = vmatpush.bf16.msra.mxu0 %v2144
    %2313 = vmatpush.bf16.msra.mxu0 %v2142
    %2314 = vmatpush.bf16.msra.mxu0 %v2140
    %2315 = vmatpush.bf16.msra.mxu0 %v2138
    %2316 = vmatpush.bf16.msra.mxu0 %v2136
    %2317 = vmatpush.bf16.msra.mxu0 %v2134
    %2318 = vmatpush.bf16.msra.mxu0 %v2132
    %2319 = vmatmul.bf16.gmra.mxu0 %v1835
    %v2320 = vpop.f32.mrf.mxu0
    %v2321 = vadd.f32 %v2307, %v2320
    %v2322 = vpop.f32.mrf.mxu0
    %v2323 = vadd.f32 %v2309, %v2322
    %2324 = vdwg.mxu0
    %2325 = vmatpush.bf16.msra.mxu0 %v2162
    %2326 = vmatpush.bf16.msra.mxu0 %v2160
    %2327 = vmatpush.bf16.msra.mxu0 %v2158
    %2328 = vmatpush.bf16.msra.mxu0 %v2156
    %2329 = vmatpush.bf16.msra.mxu0 %v2154
    %2330 = vmatpush.bf16.msra.mxu0 %v2152
    %2331 = vmatpush.bf16.msra.mxu0 %v2150
    %2332 = vmatpush.bf16.msra.mxu0 %v2148
    %2333 = vmatmul.bf16.gmra.mxu0 %v1836
    %v2334 = vpop.f32.mrf.mxu0
    %v2335 = vadd.f32 %v2321, %v2334
    %v2336 = vpop.f32.mrf.mxu0
    %v2337 = vadd.f32 %v2323, %v2336
    %2338 = vdwg.mxu0
    %v2339 = vmax.f32 %v2279, 0.0
    %v2340 = vmax.f32 %v2335, 0.0
    %v2341 = vmax.f32 %v2281, 0.0
    %v2342 = vmax.f32 %v2337, 0.0
    %v2343 = vpack.c.bf16 %v2341, %v2339
    %v2344 = vpack.c.bf16 %v2342, %v2340
    %v2345 = vld [vmem:[%s5] sm:$0xf]
    %v2346 = vld [vmem:[%s5 + $0x4] sm:$0xf]
    %v2347 = vld [vmem:[%s5 + $0x8] sm:$0xf]
    %v2348 = vld [vmem:[%s5 + $0xc] sm:$0xf]
    %v2349 = vld [vmem:[%s5 + $0x10] sm:$0xf]
    %v2350 = vld [vmem:[%s5 + $0x14] sm:$0xf]
    %v2351 = vld [vmem:[%s5 + $0x18] sm:$0xf]
    %v2352 = vld [vmem:[%s5 + $0x1c] sm:$0xf]
    %v2353 = vld [vmem:[%s5 + $0x20] sm:$0xf]
    %v2354 = vld [vmem:[%s5 + $0x24] sm:$0xf]
    %v2355 = vld [vmem:[%s5 + $0x28] sm:$0xf]
    %v2356 = vld [vmem:[%s5 + $0x2c] sm:$0xf]
    %v2357 = vld [vmem:[%s5 + $0x30] sm:$0xf]
    %v2358 = vld [vmem:[%s5 + $0x34] sm:$0xf]
    %v2359 = vld [vmem:[%s5 + $0x38] sm:$0xf]
    %v2360 = vld [vmem:[%s5 + $0x3c] sm:$0xf]
    %v2361 = vld [vmem:[%s5 + $0x40] sm:$0xf]
    %v2362 = vld [vmem:[%s5 + $0x44] sm:$0xf]
    %v2363 = vld [vmem:[%s5 + $0x48] sm:$0xf]
    %v2364 = vld [vmem:[%s5 + $0x4c] sm:$0xf]
    %v2365 = vld [vmem:[%s5 + $0x50] sm:$0xf]
    %v2366 = vld [vmem:[%s5 + $0x54] sm:$0xf]
    %v2367 = vld [vmem:[%s5 + $0x58] sm:$0xf]
    %v2368 = vld [vmem:[%s5 + $0x5c] sm:$0xf]
    %v2369 = vld [vmem:[%s5 + $0x60] sm:$0xf]
    %v2370 = vld [vmem:[%s5 + $0x64] sm:$0xf]
    %v2371 = vld [vmem:[%s5 + $0x68] sm:$0xf]
    %v2372 = vld [vmem:[%s5 + $0x6c] sm:$0xf]
    %v2373 = vld [vmem:[%s5 + $0x70] sm:$0xf]
    %v2374 = vld [vmem:[%s5 + $0x74] sm:$0xf]
    %v2375 = vld [vmem:[%s5 + $0x78] sm:$0xf]
    %v2376 = vld [vmem:[%s5 + $0x7c] sm:$0xf]
    %v2377 = vld [vmem:[%s6] sm:$0x1]
    %v2379 = vperm.slane %v2377, 0
    %v2413 = vunpack.c.l.b16 %v2345
    %v2414 = vunpack.c.l.b16 %v2346
    %v2415 = vunpack.c.l.b16 %v2347
    %v2416 = vunpack.c.l.b16 %v2348
    %v2417 = vunpack.c.l.b16 %v2349
    %v2418 = vunpack.c.l.b16 %v2350
    %v2419 = vunpack.c.l.b16 %v2351
    %v2420 = vunpack.c.l.b16 %v2352
    %v2421 = vunpack.c.l.b16 %v2353
    %v2422 = vunpack.c.l.b16 %v2354
    %v2423 = vunpack.c.l.b16 %v2355
    %v2424 = vunpack.c.l.b16 %v2356
    %v2425 = vunpack.c.l.b16 %v2357
    %v2426 = vunpack.c.l.b16 %v2358
    %v2427 = vunpack.c.l.b16 %v2359
    %v2428 = vunpack.c.l.b16 %v2360
    %v2429 = vunpack.c.l.b16 %v2361
    %v2430 = vunpack.c.l.b16 %v2362
    %v2431 = vunpack.c.l.b16 %v2363
    %v2432 = vunpack.c.l.b16 %v2364
    %v2433 = vunpack.c.l.b16 %v2365
    %v2434 = vunpack.c.l.b16 %v2366
    %v2435 = vunpack.c.l.b16 %v2367
    %v2436 = vunpack.c.l.b16 %v2368
    %v2437 = vunpack.c.l.b16 %v2369
    %v2438 = vunpack.c.l.b16 %v2370
    %v2439 = vunpack.c.l.b16 %v2371
    %v2440 = vunpack.c.l.b16 %v2372
    %v2441 = vunpack.c.l.b16 %v2373
    %v2442 = vunpack.c.l.b16 %v2374
    %v2443 = vunpack.c.l.b16 %v2375
    %v2444 = vunpack.c.l.b16 %v2376
    %v2445 = vpack.c.b16 %v2414, %v2413
    %v2446 = vpack.c.b16 %v2416, %v2415
    %v2447 = vpack.c.b16 %v2418, %v2417
    %v2448 = vpack.c.b16 %v2420, %v2419
    %v2449 = vpack.c.b16 %v2422, %v2421
    %v2450 = vpack.c.b16 %v2424, %v2423
    %v2451 = vpack.c.b16 %v2426, %v2425
    %v2452 = vpack.c.b16 %v2428, %v2427
    %v2453 = vpack.c.b16 %v2430, %v2429
    %v2454 = vpack.c.b16 %v2432, %v2431
    %v2455 = vpack.c.b16 %v2434, %v2433
    %v2456 = vpack.c.b16 %v2436, %v2435
    %v2457 = vpack.c.b16 %v2438, %v2437
    %v2458 = vpack.c.b16 %v2440, %v2439
    %v2459 = vpack.c.b16 %v2442, %v2441
    %v2460 = vpack.c.b16 %v2444, %v2443
    %2477 = vmatpush.bf16.msra.mxu0 %v2452
    %2478 = vmatpush.bf16.msra.mxu0 %v2451
    %2479 = vmatpush.bf16.msra.mxu0 %v2450
    %2480 = vmatpush.bf16.msra.mxu0 %v2449
    %2481 = vmatpush.bf16.msra.mxu0 %v2448
    %2482 = vmatpush.bf16.msra.mxu0 %v2447
    %2483 = vmatpush.bf16.msra.mxu0 %v2446
    %2484 = vmatpush.bf16.msra.mxu0 %v2445
    %2485 = vmatmul.bf16.gmra.mxu0 %v2343
    %v2486 = vpop.f32.mrf.mxu0
    %v2487 = vadd.f32 %v2379, %v2486
    %v2488 = vpop.f32.mrf.mxu0
    %v2489 = vadd.f32 %v2379, %v2488
    %2490 = vdwg.mxu0
    %2491 = vmatpush.bf16.msra.mxu0 %v2460
    %2492 = vmatpush.bf16.msra.mxu0 %v2459
    %2493 = vmatpush.bf16.msra.mxu0 %v2458
    %2494 = vmatpush.bf16.msra.mxu0 %v2457
    %2495 = vmatpush.bf16.msra.mxu0 %v2456
    %2496 = vmatpush.bf16.msra.mxu0 %v2455
    %2497 = vmatpush.bf16.msra.mxu0 %v2454
    %2498 = vmatpush.bf16.msra.mxu0 %v2453
    %2499 = vmatmul.bf16.gmra.mxu0 %v2344
    %v2500 = vpop.f32.mrf.mxu0
    %v2501 = vadd.f32 %v2487, %v2500
    %v2502 = vpop.f32.mrf.mxu0
    %v2503 = vadd.f32 %v2489, %v2502
    %2504 = vdwg.mxu0
    %2505 = vst [vmem:[%s7] sm:$0xff] %v2501
    %2506 = vst [vmem:[%s7 + $0x8] sm:$0xff] %v2503
    // Predicated region
    $region38: #{mnist_variational_encoder.1} parent=1 // pred_check
      _
    $region39: #{mnist_variational_encoder.1} parent=1 // pred_check_branch
      %2508 = sbr.rel (0) target = $region41
    $region40: #{mnist_variational_encoder.1} parent=1 // pred_region
      _
    $region41: #{mnist_variational_encoder.1} parent=1 // pred_fallthru
      _
    // Predicated region
    $region42: #{mnist_variational_encoder.1} parent=1 // pred_check
      _
    $region43: #{mnist_variational_encoder.1} parent=1 // pred_check_branch
      %2510 = sbr.rel (0) target = $region45
    $region44: #{mnist_variational_encoder.1} parent=1 // pred_region
      _
    $region45: #{mnist_variational_encoder.1} parent=1 // pred_fallthru
      _
    %2511 = vsyncpa [#allocation3], 1
    %2512 = vsyncpa [#allocation5], 1

</llo_original>
